<compile_context>
chip_gen: v7x
topology: tpu7x:2x2x1
jax: 0.10.0
libtpu: 0.0.40
codegen_flags: <defaults>
</compile_context>

<pallas_src>
import functools

import jax
import jax.numpy as jnp
from jax import lax
from jax.experimental import pallas as pl
from jax.experimental.pallas import tpu as pltpu


def _conv3x3_tanh_kernel(x_ref, w_ref, b_ref, o_ref, *, C, Cout, H, W):
    """One batch element per grid step, NCHW layout (W on lanes, H on sublanes).

    x_ref: (1, C, H, W)      VMEM input tile
    w_ref: (Cout*C*3*3,)     SMEM f32 scalars, flattened PyTorch (Cout, Cin, kh, kw)
    b_ref: (Cout,)           SMEM f32 scalars
    o_ref: (1, Cout, H, W)   VMEM output tile (lane-dense along W)
    """
    # Border-validity masks for the +/-1 shifted windows (zero padding of a SAME conv).
    row = lax.broadcasted_iota(jnp.int32, (H, W), 0)
    col = lax.broadcasted_iota(jnp.int32, (H, W), 1)
    top_ok = row >= 1          # valid region when reading row h-1  (dy = -1)
    bot_ok = row < H - 1       # valid region when reading row h+1  (dy = +1)
    lft_ok = col >= 1          # dx = -1
    rgt_ok = col < W - 1       # dx = +1

    # f32 accumulators, one (H, W) plane per output channel (Cout is tiny).
    acc = [jnp.zeros((H, W), jnp.float32) for _ in range(Cout)]

    for ci in range(C):
        xc = x_ref[0, ci].astype(jnp.float32)                     # (H, W)
        for ky, dy in enumerate((-1, 0, 1)):
            if dy == 0:
                xr = xc
            else:
                # xr[h, w] = xc[h + dy, w], zero outside the image (XLU roll + VPU select).
                xr = pltpu.roll(xc, shift=(-dy) % H, axis=0)
                xr = jnp.where(bot_ok if dy == 1 else top_ok, xr, 0.0)
            for kx, dx in enumerate((-1, 0, 1)):
                if dx == 0:
                    xs = xr
                else:
                    # xs[h, w] = xr[h, w + dx], zero outside the image.
                    xs = pltpu.roll(xr, shift=(-dx) % W, axis=1)
                    xs = jnp.where(rgt_ok if dx == 1 else lft_ok, xs, 0.0)
                # VPU broadcast-FMA with a weight scalar read from SMEM.
                for co in range(Cout):
                    w = w_ref[((co * C + ci) * 3 + ky) * 3 + kx]
                    acc[co] = acc[co] + w * xs

    for co in range(Cout):
        o_ref[0, co] = jnp.tanh(acc[co] + b_ref[co]).astype(o_ref.dtype)


def generator_forward(x_nchw, weight, bias):
    """Forward pass of Generator.

    Args:
      x_nchw: (N, C, H, W) float32 input representation.
      weight: (Cout=3, Cin, 3, 3) conv weight (PyTorch OIHW layout).
      bias:   (Cout=3,) conv bias.
    Returns:
      (N, 3, H, W) float32 image in (-1, 1).
    """
    N, C, H, W = x_nchw.shape
    Cout = int(weight.shape[0])

    # Tiny parameter tables -> flattened f32 vectors living in SMEM inside the kernel.
    w_flat = weight.astype(jnp.float32).reshape(-1)               # (Cout*C*9,)
    b_flat = bias.astype(jnp.float32).reshape(-1)                 # (Cout,)

    kernel = functools.partial(_conv3x3_tanh_kernel, C=C, Cout=Cout, H=H, W=W)

    return pl.pallas_call(
        kernel,
        out_shape=jax.ShapeDtypeStruct((N, Cout, H, W), x_nchw.dtype),
        grid_spec=pltpu.PrefetchScalarGridSpec(
            num_scalar_prefetch=0,
            grid=(N,),
            in_specs=[
                # Full-image block per batch element: last two dims equal the array
                # extents, so the (8,128) divisibility rule is satisfied for any H, W.
                pl.BlockSpec((1, C, H, W), lambda n: (n, 0, 0, 0)),
                pl.BlockSpec(memory_space=pltpu.MemorySpace.SMEM),   # weights (scalars)
                pl.BlockSpec(memory_space=pltpu.MemorySpace.SMEM),   # bias    (scalars)
            ],
            out_specs=pl.BlockSpec((1, Cout, H, W), lambda n: (n, 0, 0, 0)),
        ),
        compiler_params=pltpu.CompilerParams(
            dimension_semantics=("parallel",),      # shard batch across cores (megacore/v7x)
            vmem_limit_bytes=32 * 1024 * 1024,      # explicit, v7x-safe VMEM budget
        ),
    )(x_nchw, w_flat, b_flat)


def _reference_forward(x_nchw, weight, bias):
    """Pure-JAX reference (lax conv) for validation."""
    y = lax.conv_general_dilated(
        x_nchw, weight,
        window_strides=(1, 1),
        padding="SAME",
        dimension_numbers=("NCHW", "OIHW", "NCHW"))
    y = y + bias.reshape(1, -1, 1, 1)
    return jnp.tanh(y)


if __name__ == "__main__":
    key = jax.random.PRNGKey(0)
    k_x, k_w, k_b = jax.random.split(key, 3)

    N, Cin, H, W = 2, 4, 16, 16
    Cout, K = 3, 3

    x = jax.random.normal(k_x, (N, Cin, H, W), dtype=jnp.float32)
    # Deterministic synthetic parameters (shapes match nn.Conv2d(Cin, 3, 3, bias=True)).
    weight = jax.random.normal(k_w, (Cout, Cin, K, K), dtype=jnp.float32) * 0.1
    bias = jax.random.normal(k_b, (Cout,), dtype=jnp.float32) * 0.1

    out = jax.block_until_ready(generator_forward(x, weight, bias))
    ref = jax.block_until_ready(_reference_forward(x, weight, bias))

    assert out.shape == (N, Cout, H, W), out.shape
    assert jnp.allclose(out, ref, rtol=1e-3, atol=1e-3), "mismatch vs reference"

    print("KERNEL_OK")
</pallas_src>

<mosaic_0001>
module attributes {stable_mosaic.version = 11 : i64} {
  func.func @_conv3x3_tanh_kernel(%arg0: i32, %arg1: memref<1x4x16x16xf32, #tpu.memory_space<vmem>>, %arg2: memref<108xf32, #tpu.memory_space<smem>>, %arg3: memref<3xf32, #tpu.memory_space<smem>>, %arg4: memref<1x3x16x16xf32, #tpu.memory_space<vmem>>) attributes {dimension_semantics = [#tpu.dimension_semantics<parallel>], iteration_bounds = array<i64: 2>, scalar_prefetch = 0 : i64, scratch_operands = 0 : i64, tpu.core_type = #tpu.core_type<tc>, window_params = [{transform_indices = @transform_0, window_bounds = array<i64: 1, 4, 16, 16>}, {transform_indices = @transform_1, window_bounds = array<i64: 108>}, {transform_indices = @transform_2, window_bounds = array<i64: 3>}, {transform_indices = @transform_3, window_bounds = array<i64: 1, 3, 16, 16>}]} {
    %0 = tpu.iota {dimensions = array<i32: 0>} : vector<16x16xi32>
    %1 = tpu.iota {dimensions = array<i32: 1>} : vector<16x16xi32>
    %c1_i32 = arith.constant 1 : i32
    %2 = vector.broadcast %c1_i32 : i32 to vector<16x16xi32>
    %3 = arith.cmpi sge, %0, %2 : vector<16x16xi32>
    %c15_i32 = arith.constant 15 : i32
    %4 = vector.broadcast %c15_i32 : i32 to vector<16x16xi32>
    %5 = arith.cmpi slt, %0, %4 : vector<16x16xi32>
    %c1_i32_0 = arith.constant 1 : i32
    %6 = vector.broadcast %c1_i32_0 : i32 to vector<16x16xi32>
    %7 = arith.cmpi sge, %1, %6 : vector<16x16xi32>
    %c15_i32_1 = arith.constant 15 : i32
    %8 = vector.broadcast %c15_i32_1 : i32 to vector<16x16xi32>
    %9 = arith.cmpi slt, %1, %8 : vector<16x16xi32>
    %cst = arith.constant 0.000000e+00 : f32
    %10 = vector.broadcast %cst : f32 to vector<16x16xf32>
    %cst_2 = arith.constant 0.000000e+00 : f32
    %11 = vector.broadcast %cst_2 : f32 to vector<16x16xf32>
    %cst_3 = arith.constant 0.000000e+00 : f32
    %12 = vector.broadcast %cst_3 : f32 to vector<16x16xf32>
    %c0 = arith.constant 0 : index
    %c0_4 = arith.constant 0 : index
    %c0_5 = arith.constant 0 : index
    %c0_6 = arith.constant 0 : index
    %13 = vector.load %arg1[%c0, %c0_4, %c0_5, %c0_6] : memref<1x4x16x16xf32, #tpu.memory_space<vmem>>, vector<1x1x16x16xf32>
    %14 = vector.shape_cast %13 : vector<1x1x16x16xf32> to vector<16x16xf32>
    %c1_i32_7 = arith.constant 1 : i32
    %15 = tpu.dynamic_rotate %14 by %c1_i32_7 dim 0 : vector<16x16xf32>, i32 -> vector<16x16xf32>
    %cst_8 = arith.constant 0.000000e+00 : f32
    %16 = vector.broadcast %cst_8 : f32 to vector<16x16xf32>
    %17 = arith.select %3, %15, %16 : vector<16x16xi1>, vector<16x16xf32>
    %c1_i32_9 = arith.constant 1 : i32
    %18 = tpu.dynamic_rotate %17 by %c1_i32_9 dim 1 : vector<16x16xf32>, i32 -> vector<16x16xf32>
    %cst_10 = arith.constant 0.000000e+00 : f32
    %19 = vector.broadcast %cst_10 : f32 to vector<16x16xf32>
    %20 = arith.select %7, %18, %19 : vector<16x16xi1>, vector<16x16xf32>
    %c0_11 = arith.constant 0 : index
    %21 = memref.load %arg2[%c0_11] : memref<108xf32, #tpu.memory_space<smem>>
    %22 = vector.broadcast %21 : f32 to vector<16x16xf32>
    %23 = arith.mulf %22, %20 : vector<16x16xf32>
    %24 = arith.addf %10, %23 : vector<16x16xf32>
    %c36 = arith.constant 36 : index
    %25 = memref.load %arg2[%c36] : memref<108xf32, #tpu.memory_space<smem>>
    %26 = vector.broadcast %25 : f32 to vector<16x16xf32>
    %27 = arith.mulf %26, %20 : vector<16x16xf32>
    %28 = arith.addf %11, %27 : vector<16x16xf32>
    %c72 = arith.constant 72 : index
    %29 = memref.load %arg2[%c72] : memref<108xf32, #tpu.memory_space<smem>>
    %30 = vector.broadcast %29 : f32 to vector<16x16xf32>
    %31 = arith.mulf %30, %20 : vector<16x16xf32>
    %32 = arith.addf %12, %31 : vector<16x16xf32>
    %c1 = arith.constant 1 : index
    %33 = memref.load %arg2[%c1] : memref<108xf32, #tpu.memory_space<smem>>
    %34 = vector.broadcast %33 : f32 to vector<16x16xf32>
    %35 = arith.mulf %34, %17 : vector<16x16xf32>
    %36 = arith.addf %24, %35 : vector<16x16xf32>
    %c37 = arith.constant 37 : index
    %37 = memref.load %arg2[%c37] : memref<108xf32, #tpu.memory_space<smem>>
    %38 = vector.broadcast %37 : f32 to vector<16x16xf32>
    %39 = arith.mulf %38, %17 : vector<16x16xf32>
    %40 = arith.addf %28, %39 : vector<16x16xf32>
    %c73 = arith.constant 73 : index
    %41 = memref.load %arg2[%c73] : memref<108xf32, #tpu.memory_space<smem>>
    %42 = vector.broadcast %41 : f32 to vector<16x16xf32>
    %43 = arith.mulf %42, %17 : vector<16x16xf32>
    %44 = arith.addf %32, %43 : vector<16x16xf32>
    %c15_i32_12 = arith.constant 15 : i32
    %45 = tpu.dynamic_rotate %17 by %c15_i32_12 dim 1 : vector<16x16xf32>, i32 -> vector<16x16xf32>
    %cst_13 = arith.constant 0.000000e+00 : f32
    %46 = vector.broadcast %cst_13 : f32 to vector<16x16xf32>
    %47 = arith.select %9, %45, %46 : vector<16x16xi1>, vector<16x16xf32>
    %c2 = arith.constant 2 : index
    %48 = memref.load %arg2[%c2] : memref<108xf32, #tpu.memory_space<smem>>
    %49 = vector.broadcast %48 : f32 to vector<16x16xf32>
    %50 = arith.mulf %49, %47 : vector<16x16xf32>
    %51 = arith.addf %36, %50 : vector<16x16xf32>
    %c38 = arith.constant 38 : index
    %52 = memref.load %arg2[%c38] : memref<108xf32, #tpu.memory_space<smem>>
    %53 = vector.broadcast %52 : f32 to vector<16x16xf32>
    %54 = arith.mulf %53, %47 : vector<16x16xf32>
    %55 = arith.addf %40, %54 : vector<16x16xf32>
    %c74 = arith.constant 74 : index
    %56 = memref.load %arg2[%c74] : memref<108xf32, #tpu.memory_space<smem>>
    %57 = vector.broadcast %56 : f32 to vector<16x16xf32>
    %58 = arith.mulf %57, %47 : vector<16x16xf32>
    %59 = arith.addf %44, %58 : vector<16x16xf32>
    %c1_i32_14 = arith.constant 1 : i32
    %60 = tpu.dynamic_rotate %14 by %c1_i32_14 dim 1 : vector<16x16xf32>, i32 -> vector<16x16xf32>
    %cst_15 = arith.constant 0.000000e+00 : f32
    %61 = vector.broadcast %cst_15 : f32 to vector<16x16xf32>
    %62 = arith.select %7, %60, %61 : vector<16x16xi1>, vector<16x16xf32>
    %c3 = arith.constant 3 : index
    %63 = memref.load %arg2[%c3] : memref<108xf32, #tpu.memory_space<smem>>
    %64 = vector.broadcast %63 : f32 to vector<16x16xf32>
    %65 = arith.mulf %64, %62 : vector<16x16xf32>
    %66 = arith.addf %51, %65 : vector<16x16xf32>
    %c39 = arith.constant 39 : index
    %67 = memref.load %arg2[%c39] : memref<108xf32, #tpu.memory_space<smem>>
    %68 = vector.broadcast %67 : f32 to vector<16x16xf32>
    %69 = arith.mulf %68, %62 : vector<16x16xf32>
    %70 = arith.addf %55, %69 : vector<16x16xf32>
    %c75 = arith.constant 75 : index
    %71 = memref.load %arg2[%c75] : memref<108xf32, #tpu.memory_space<smem>>
    %72 = vector.broadcast %71 : f32 to vector<16x16xf32>
    %73 = arith.mulf %72, %62 : vector<16x16xf32>
    %74 = arith.addf %59, %73 : vector<16x16xf32>
    %c4 = arith.constant 4 : index
    %75 = memref.load %arg2[%c4] : memref<108xf32, #tpu.memory_space<smem>>
    %76 = vector.broadcast %75 : f32 to vector<16x16xf32>
    %77 = arith.mulf %76, %14 : vector<16x16xf32>
    %78 = arith.addf %66, %77 : vector<16x16xf32>
    %c40 = arith.constant 40 : index
    %79 = memref.load %arg2[%c40] : memref<108xf32, #tpu.memory_space<smem>>
    %80 = vector.broadcast %79 : f32 to vector<16x16xf32>
    %81 = arith.mulf %80, %14 : vector<16x16xf32>
    %82 = arith.addf %70, %81 : vector<16x16xf32>
    %c76 = arith.constant 76 : index
    %83 = memref.load %arg2[%c76] : memref<108xf32, #tpu.memory_space<smem>>
    %84 = vector.broadcast %83 : f32 to vector<16x16xf32>
    %85 = arith.mulf %84, %14 : vector<16x16xf32>
    %86 = arith.addf %74, %85 : vector<16x16xf32>
    %c15_i32_16 = arith.constant 15 : i32
    %87 = tpu.dynamic_rotate %14 by %c15_i32_16 dim 1 : vector<16x16xf32>, i32 -> vector<16x16xf32>
    %cst_17 = arith.constant 0.000000e+00 : f32
    %88 = vector.broadcast %cst_17 : f32 to vector<16x16xf32>
    %89 = arith.select %9, %87, %88 : vector<16x16xi1>, vector<16x16xf32>
    %c5 = arith.constant 5 : index
    %90 = memref.load %arg2[%c5] : memref<108xf32, #tpu.memory_space<smem>>
    %91 = vector.broadcast %90 : f32 to vector<16x16xf32>
    %92 = arith.mulf %91, %89 : vector<16x16xf32>
    %93 = arith.addf %78, %92 : vector<16x16xf32>
    %c41 = arith.constant 41 : index
    %94 = memref.load %arg2[%c41] : memref<108xf32, #tpu.memory_space<smem>>
    %95 = vector.broadcast %94 : f32 to vector<16x16xf32>
    %96 = arith.mulf %95, %89 : vector<16x16xf32>
    %97 = arith.addf %82, %96 : vector<16x16xf32>
    %c77 = arith.constant 77 : index
    %98 = memref.load %arg2[%c77] : memref<108xf32, #tpu.memory_space<smem>>
    %99 = vector.broadcast %98 : f32 to vector<16x16xf32>
    %100 = arith.mulf %99, %89 : vector<16x16xf32>
    %101 = arith.addf %86, %100 : vector<16x16xf32>
    %c15_i32_18 = arith.constant 15 : i32
    %102 = tpu.dynamic_rotate %14 by %c15_i32_18 dim 0 : vector<16x16xf32>, i32 -> vector<16x16xf32>
    %cst_19 = arith.constant 0.000000e+00 : f32
    %103 = vector.broadcast %cst_19 : f32 to vector<16x16xf32>
    %104 = arith.select %5, %102, %103 : vector<16x16xi1>, vector<16x16xf32>
    %c1_i32_20 = arith.constant 1 : i32
    %105 = tpu.dynamic_rotate %104 by %c1_i32_20 dim 1 : vector<16x16xf32>, i32 -> vector<16x16xf32>
    %cst_21 = arith.constant 0.000000e+00 : f32
    %106 = vector.broadcast %cst_21 : f32 to vector<16x16xf32>
    %107 = arith.select %7, %105, %106 : vector<16x16xi1>, vector<16x16xf32>
    %c6 = arith.constant 6 : index
    %108 = memref.load %arg2[%c6] : memref<108xf32, #tpu.memory_space<smem>>
    %109 = vector.broadcast %108 : f32 to vector<16x16xf32>
    %110 = arith.mulf %109, %107 : vector<16x16xf32>
    %111 = arith.addf %93, %110 : vector<16x16xf32>
    %c42 = arith.constant 42 : index
    %112 = memref.load %arg2[%c42] : memref<108xf32, #tpu.memory_space<smem>>
    %113 = vector.broadcast %112 : f32 to vector<16x16xf32>
    %114 = arith.mulf %113, %107 : vector<16x16xf32>
    %115 = arith.addf %97, %114 : vector<16x16xf32>
    %c78 = arith.constant 78 : index
    %116 = memref.load %arg2[%c78] : memref<108xf32, #tpu.memory_space<smem>>
    %117 = vector.broadcast %116 : f32 to vector<16x16xf32>
    %118 = arith.mulf %117, %107 : vector<16x16xf32>
    %119 = arith.addf %101, %118 : vector<16x16xf32>
    %c7 = arith.constant 7 : index
    %120 = memref.load %arg2[%c7] : memref<108xf32, #tpu.memory_space<smem>>
    %121 = vector.broadcast %120 : f32 to vector<16x16xf32>
    %122 = arith.mulf %121, %104 : vector<16x16xf32>
    %123 = arith.addf %111, %122 : vector<16x16xf32>
    %c43 = arith.constant 43 : index
    %124 = memref.load %arg2[%c43] : memref<108xf32, #tpu.memory_space<smem>>
    %125 = vector.broadcast %124 : f32 to vector<16x16xf32>
    %126 = arith.mulf %125, %104 : vector<16x16xf32>
    %127 = arith.addf %115, %126 : vector<16x16xf32>
    %c79 = arith.constant 79 : index
    %128 = memref.load %arg2[%c79] : memref<108xf32, #tpu.memory_space<smem>>
    %129 = vector.broadcast %128 : f32 to vector<16x16xf32>
    %130 = arith.mulf %129, %104 : vector<16x16xf32>
    %131 = arith.addf %119, %130 : vector<16x16xf32>
    %c15_i32_22 = arith.constant 15 : i32
    %132 = tpu.dynamic_rotate %104 by %c15_i32_22 dim 1 : vector<16x16xf32>, i32 -> vector<16x16xf32>
    %cst_23 = arith.constant 0.000000e+00 : f32
    %133 = vector.broadcast %cst_23 : f32 to vector<16x16xf32>
    %134 = arith.select %9, %132, %133 : vector<16x16xi1>, vector<16x16xf32>
    %c8 = arith.constant 8 : index
    %135 = memref.load %arg2[%c8] : memref<108xf32, #tpu.memory_space<smem>>
    %136 = vector.broadcast %135 : f32 to vector<16x16xf32>
    %137 = arith.mulf %136, %134 : vector<16x16xf32>
    %138 = arith.addf %123, %137 : vector<16x16xf32>
    %c44 = arith.constant 44 : index
    %139 = memref.load %arg2[%c44] : memref<108xf32, #tpu.memory_space<smem>>
    %140 = vector.broadcast %139 : f32 to vector<16x16xf32>
    %141 = arith.mulf %140, %134 : vector<16x16xf32>
    %142 = arith.addf %127, %141 : vector<16x16xf32>
    %c80 = arith.constant 80 : index
    %143 = memref.load %arg2[%c80] : memref<108xf32, #tpu.memory_space<smem>>
    %144 = vector.broadcast %143 : f32 to vector<16x16xf32>
    %145 = arith.mulf %144, %134 : vector<16x16xf32>
    %146 = arith.addf %131, %145 : vector<16x16xf32>
    %c0_24 = arith.constant 0 : index
    %c1_25 = arith.constant 1 : index
    %c0_26 = arith.constant 0 : index
    %c0_27 = arith.constant 0 : index
    %147 = vector.load %arg1[%c0_24, %c1_25, %c0_26, %c0_27] : memref<1x4x16x16xf32, #tpu.memory_space<vmem>>, vector<1x1x16x16xf32>
    %148 = vector.shape_cast %147 : vector<1x1x16x16xf32> to vector<16x16xf32>
    %c1_i32_28 = arith.constant 1 : i32
    %149 = tpu.dynamic_rotate %148 by %c1_i32_28 dim 0 : vector<16x16xf32>, i32 -> vector<16x16xf32>
    %cst_29 = arith.constant 0.000000e+00 : f32
    %150 = vector.broadcast %cst_29 : f32 to vector<16x16xf32>
    %151 = arith.select %3, %149, %150 : vector<16x16xi1>, vector<16x16xf32>
    %c1_i32_30 = arith.constant 1 : i32
    %152 = tpu.dynamic_rotate %151 by %c1_i32_30 dim 1 : vector<16x16xf32>, i32 -> vector<16x16xf32>
    %cst_31 = arith.constant 0.000000e+00 : f32
    %153 = vector.broadcast %cst_31 : f32 to vector<16x16xf32>
    %154 = arith.select %7, %152, %153 : vector<16x16xi1>, vector<16x16xf32>
    %c9 = arith.constant 9 : index
    %155 = memref.load %arg2[%c9] : memref<108xf32, #tpu.memory_space<smem>>
    %156 = vector.broadcast %155 : f32 to vector<16x16xf32>
    %157 = arith.mulf %156, %154 : vector<16x16xf32>
    %158 = arith.addf %138, %157 : vector<16x16xf32>
    %c45 = arith.constant 45 : index
    %159 = memref.load %arg2[%c45] : memref<108xf32, #tpu.memory_space<smem>>
    %160 = vector.broadcast %159 : f32 to vector<16x16xf32>
    %161 = arith.mulf %160, %154 : vector<16x16xf32>
    %162 = arith.addf %142, %161 : vector<16x16xf32>
    %c81 = arith.constant 81 : index
    %163 = memref.load %arg2[%c81] : memref<108xf32, #tpu.memory_space<smem>>
    %164 = vector.broadcast %163 : f32 to vector<16x16xf32>
    %165 = arith.mulf %164, %154 : vector<16x16xf32>
    %166 = arith.addf %146, %165 : vector<16x16xf32>
    %c10 = arith.constant 10 : index
    %167 = memref.load %arg2[%c10] : memref<108xf32, #tpu.memory_space<smem>>
    %168 = vector.broadcast %167 : f32 to vector<16x16xf32>
    %169 = arith.mulf %168, %151 : vector<16x16xf32>
    %170 = arith.addf %158, %169 : vector<16x16xf32>
    %c46 = arith.constant 46 : index
    %171 = memref.load %arg2[%c46] : memref<108xf32, #tpu.memory_space<smem>>
    %172 = vector.broadcast %171 : f32 to vector<16x16xf32>
    %173 = arith.mulf %172, %151 : vector<16x16xf32>
    %174 = arith.addf %162, %173 : vector<16x16xf32>
    %c82 = arith.constant 82 : index
    %175 = memref.load %arg2[%c82] : memref<108xf32, #tpu.memory_space<smem>>
    %176 = vector.broadcast %175 : f32 to vector<16x16xf32>
    %177 = arith.mulf %176, %151 : vector<16x16xf32>
    %178 = arith.addf %166, %177 : vector<16x16xf32>
    %c15_i32_32 = arith.constant 15 : i32
    %179 = tpu.dynamic_rotate %151 by %c15_i32_32 dim 1 : vector<16x16xf32>, i32 -> vector<16x16xf32>
    %cst_33 = arith.constant 0.000000e+00 : f32
    %180 = vector.broadcast %cst_33 : f32 to vector<16x16xf32>
    %181 = arith.select %9, %179, %180 : vector<16x16xi1>, vector<16x16xf32>
    %c11 = arith.constant 11 : index
    %182 = memref.load %arg2[%c11] : memref<108xf32, #tpu.memory_space<smem>>
    %183 = vector.broadcast %182 : f32 to vector<16x16xf32>
    %184 = arith.mulf %183, %181 : vector<16x16xf32>
    %185 = arith.addf %170, %184 : vector<16x16xf32>
    %c47 = arith.constant 47 : index
    %186 = memref.load %arg2[%c47] : memref<108xf32, #tpu.memory_space<smem>>
    %187 = vector.broadcast %186 : f32 to vector<16x16xf32>
    %188 = arith.mulf %187, %181 : vector<16x16xf32>
    %189 = arith.addf %174, %188 : vector<16x16xf32>
    %c83 = arith.constant 83 : index
    %190 = memref.load %arg2[%c83] : memref<108xf32, #tpu.memory_space<smem>>
    %191 = vector.broadcast %190 : f32 to vector<16x16xf32>
    %192 = arith.mulf %191, %181 : vector<16x16xf32>
    %193 = arith.addf %178, %192 : vector<16x16xf32>
    %c1_i32_34 = arith.constant 1 : i32
    %194 = tpu.dynamic_rotate %148 by %c1_i32_34 dim 1 : vector<16x16xf32>, i32 -> vector<16x16xf32>
    %cst_35 = arith.constant 0.000000e+00 : f32
    %195 = vector.broadcast %cst_35 : f32 to vector<16x16xf32>
    %196 = arith.select %7, %194, %195 : vector<16x16xi1>, vector<16x16xf32>
    %c12 = arith.constant 12 : index
    %197 = memref.load %arg2[%c12] : memref<108xf32, #tpu.memory_space<smem>>
    %198 = vector.broadcast %197 : f32 to vector<16x16xf32>
    %199 = arith.mulf %198, %196 : vector<16x16xf32>
    %200 = arith.addf %185, %199 : vector<16x16xf32>
    %c48 = arith.constant 48 : index
    %201 = memref.load %arg2[%c48] : memref<108xf32, #tpu.memory_space<smem>>
    %202 = vector.broadcast %201 : f32 to vector<16x16xf32>
    %203 = arith.mulf %202, %196 : vector<16x16xf32>
    %204 = arith.addf %189, %203 : vector<16x16xf32>
    %c84 = arith.constant 84 : index
    %205 = memref.load %arg2[%c84] : memref<108xf32, #tpu.memory_space<smem>>
    %206 = vector.broadcast %205 : f32 to vector<16x16xf32>
    %207 = arith.mulf %206, %196 : vector<16x16xf32>
    %208 = arith.addf %193, %207 : vector<16x16xf32>
    %c13 = arith.constant 13 : index
    %209 = memref.load %arg2[%c13] : memref<108xf32, #tpu.memory_space<smem>>
    %210 = vector.broadcast %209 : f32 to vector<16x16xf32>
    %211 = arith.mulf %210, %148 : vector<16x16xf32>
    %212 = arith.addf %200, %211 : vector<16x16xf32>
    %c49 = arith.constant 49 : index
    %213 = memref.load %arg2[%c49] : memref<108xf32, #tpu.memory_space<smem>>
    %214 = vector.broadcast %213 : f32 to vector<16x16xf32>
    %215 = arith.mulf %214, %148 : vector<16x16xf32>
    %216 = arith.addf %204, %215 : vector<16x16xf32>
    %c85 = arith.constant 85 : index
    %217 = memref.load %arg2[%c85] : memref<108xf32, #tpu.memory_space<smem>>
    %218 = vector.broadcast %217 : f32 to vector<16x16xf32>
    %219 = arith.mulf %218, %148 : vector<16x16xf32>
    %220 = arith.addf %208, %219 : vector<16x16xf32>
    %c15_i32_36 = arith.constant 15 : i32
    %221 = tpu.dynamic_rotate %148 by %c15_i32_36 dim 1 : vector<16x16xf32>, i32 -> vector<16x16xf32>
    %cst_37 = arith.constant 0.000000e+00 : f32
    %222 = vector.broadcast %cst_37 : f32 to vector<16x16xf32>
    %223 = arith.select %9, %221, %222 : vector<16x16xi1>, vector<16x16xf32>
    %c14 = arith.constant 14 : index
    %224 = memref.load %arg2[%c14] : memref<108xf32, #tpu.memory_space<smem>>
    %225 = vector.broadcast %224 : f32 to vector<16x16xf32>
    %226 = arith.mulf %225, %223 : vector<16x16xf32>
    %227 = arith.addf %212, %226 : vector<16x16xf32>
    %c50 = arith.constant 50 : index
    %228 = memref.load %arg2[%c50] : memref<108xf32, #tpu.memory_space<smem>>
    %229 = vector.broadcast %228 : f32 to vector<16x16xf32>
    %230 = arith.mulf %229, %223 : vector<16x16xf32>
    %231 = arith.addf %216, %230 : vector<16x16xf32>
    %c86 = arith.constant 86 : index
    %232 = memref.load %arg2[%c86] : memref<108xf32, #tpu.memory_space<smem>>
    %233 = vector.broadcast %232 : f32 to vector<16x16xf32>
    %234 = arith.mulf %233, %223 : vector<16x16xf32>
    %235 = arith.addf %220, %234 : vector<16x16xf32>
    %c15_i32_38 = arith.constant 15 : i32
    %236 = tpu.dynamic_rotate %148 by %c15_i32_38 dim 0 : vector<16x16xf32>, i32 -> vector<16x16xf32>
    %cst_39 = arith.constant 0.000000e+00 : f32
    %237 = vector.broadcast %cst_39 : f32 to vector<16x16xf32>
    %238 = arith.select %5, %236, %237 : vector<16x16xi1>, vector<16x16xf32>
    %c1_i32_40 = arith.constant 1 : i32
    %239 = tpu.dynamic_rotate %238 by %c1_i32_40 dim 1 : vector<16x16xf32>, i32 -> vector<16x16xf32>
    %cst_41 = arith.constant 0.000000e+00 : f32
    %240 = vector.broadcast %cst_41 : f32 to vector<16x16xf32>
    %241 = arith.select %7, %239, %240 : vector<16x16xi1>, vector<16x16xf32>
    %c15 = arith.constant 15 : index
    %242 = memref.load %arg2[%c15] : memref<108xf32, #tpu.memory_space<smem>>
    %243 = vector.broadcast %242 : f32 to vector<16x16xf32>
    %244 = arith.mulf %243, %241 : vector<16x16xf32>
    %245 = arith.addf %227, %244 : vector<16x16xf32>
    %c51 = arith.constant 51 : index
    %246 = memref.load %arg2[%c51] : memref<108xf32, #tpu.memory_space<smem>>
    %247 = vector.broadcast %246 : f32 to vector<16x16xf32>
    %248 = arith.mulf %247, %241 : vector<16x16xf32>
    %249 = arith.addf %231, %248 : vector<16x16xf32>
    %c87 = arith.constant 87 : index
    %250 = memref.load %arg2[%c87] : memref<108xf32, #tpu.memory_space<smem>>
    %251 = vector.broadcast %250 : f32 to vector<16x16xf32>
    %252 = arith.mulf %251, %241 : vector<16x16xf32>
    %253 = arith.addf %235, %252 : vector<16x16xf32>
    %c16 = arith.constant 16 : index
    %254 = memref.load %arg2[%c16] : memref<108xf32, #tpu.memory_space<smem>>
    %255 = vector.broadcast %254 : f32 to vector<16x16xf32>
    %256 = arith.mulf %255, %238 : vector<16x16xf32>
    %257 = arith.addf %245, %256 : vector<16x16xf32>
    %c52 = arith.constant 52 : index
    %258 = memref.load %arg2[%c52] : memref<108xf32, #tpu.memory_space<smem>>
    %259 = vector.broadcast %258 : f32 to vector<16x16xf32>
    %260 = arith.mulf %259, %238 : vector<16x16xf32>
    %261 = arith.addf %249, %260 : vector<16x16xf32>
    %c88 = arith.constant 88 : index
    %262 = memref.load %arg2[%c88] : memref<108xf32, #tpu.memory_space<smem>>
    %263 = vector.broadcast %262 : f32 to vector<16x16xf32>
    %264 = arith.mulf %263, %238 : vector<16x16xf32>
    %265 = arith.addf %253, %264 : vector<16x16xf32>
    %c15_i32_42 = arith.constant 15 : i32
    %266 = tpu.dynamic_rotate %238 by %c15_i32_42 dim 1 : vector<16x16xf32>, i32 -> vector<16x16xf32>
    %cst_43 = arith.constant 0.000000e+00 : f32
    %267 = vector.broadcast %cst_43 : f32 to vector<16x16xf32>
    %268 = arith.select %9, %266, %267 : vector<16x16xi1>, vector<16x16xf32>
    %c17 = arith.constant 17 : index
    %269 = memref.load %arg2[%c17] : memref<108xf32, #tpu.memory_space<smem>>
    %270 = vector.broadcast %269 : f32 to vector<16x16xf32>
    %271 = arith.mulf %270, %268 : vector<16x16xf32>
    %272 = arith.addf %257, %271 : vector<16x16xf32>
    %c53 = arith.constant 53 : index
    %273 = memref.load %arg2[%c53] : memref<108xf32, #tpu.memory_space<smem>>
    %274 = vector.broadcast %273 : f32 to vector<16x16xf32>
    %275 = arith.mulf %274, %268 : vector<16x16xf32>
    %276 = arith.addf %261, %275 : vector<16x16xf32>
    %c89 = arith.constant 89 : index
    %277 = memref.load %arg2[%c89] : memref<108xf32, #tpu.memory_space<smem>>
    %278 = vector.broadcast %277 : f32 to vector<16x16xf32>
    %279 = arith.mulf %278, %268 : vector<16x16xf32>
    %280 = arith.addf %265, %279 : vector<16x16xf32>
    %c0_44 = arith.constant 0 : index
    %c2_45 = arith.constant 2 : index
    %c0_46 = arith.constant 0 : index
    %c0_47 = arith.constant 0 : index
    %281 = vector.load %arg1[%c0_44, %c2_45, %c0_46, %c0_47] : memref<1x4x16x16xf32, #tpu.memory_space<vmem>>, vector<1x1x16x16xf32>
    %282 = vector.shape_cast %281 : vector<1x1x16x16xf32> to vector<16x16xf32>
    %c1_i32_48 = arith.constant 1 : i32
    %283 = tpu.dynamic_rotate %282 by %c1_i32_48 dim 0 : vector<16x16xf32>, i32 -> vector<16x16xf32>
    %cst_49 = arith.constant 0.000000e+00 : f32
    %284 = vector.broadcast %cst_49 : f32 to vector<16x16xf32>
    %285 = arith.select %3, %283, %284 : vector<16x16xi1>, vector<16x16xf32>
    %c1_i32_50 = arith.constant 1 : i32
    %286 = tpu.dynamic_rotate %285 by %c1_i32_50 dim 1 : vector<16x16xf32>, i32 -> vector<16x16xf32>
    %cst_51 = arith.constant 0.000000e+00 : f32
    %287 = vector.broadcast %cst_51 : f32 to vector<16x16xf32>
    %288 = arith.select %7, %286, %287 : vector<16x16xi1>, vector<16x16xf32>
    %c18 = arith.constant 18 : index
    %289 = memref.load %arg2[%c18] : memref<108xf32, #tpu.memory_space<smem>>
    %290 = vector.broadcast %289 : f32 to vector<16x16xf32>
    %291 = arith.mulf %290, %288 : vector<16x16xf32>
    %292 = arith.addf %272, %291 : vector<16x16xf32>
    %c54 = arith.constant 54 : index
    %293 = memref.load %arg2[%c54] : memref<108xf32, #tpu.memory_space<smem>>
    %294 = vector.broadcast %293 : f32 to vector<16x16xf32>
    %295 = arith.mulf %294, %288 : vector<16x16xf32>
    %296 = arith.addf %276, %295 : vector<16x16xf32>
    %c90 = arith.constant 90 : index
    %297 = memref.load %arg2[%c90] : memref<108xf32, #tpu.memory_space<smem>>
    %298 = vector.broadcast %297 : f32 to vector<16x16xf32>
    %299 = arith.mulf %298, %288 : vector<16x16xf32>
    %300 = arith.addf %280, %299 : vector<16x16xf32>
    %c19 = arith.constant 19 : index
    %301 = memref.load %arg2[%c19] : memref<108xf32, #tpu.memory_space<smem>>
    %302 = vector.broadcast %301 : f32 to vector<16x16xf32>
    %303 = arith.mulf %302, %285 : vector<16x16xf32>
    %304 = arith.addf %292, %303 : vector<16x16xf32>
    %c55 = arith.constant 55 : index
    %305 = memref.load %arg2[%c55] : memref<108xf32, #tpu.memory_space<smem>>
    %306 = vector.broadcast %305 : f32 to vector<16x16xf32>
    %307 = arith.mulf %306, %285 : vector<16x16xf32>
    %308 = arith.addf %296, %307 : vector<16x16xf32>
    %c91 = arith.constant 91 : index
    %309 = memref.load %arg2[%c91] : memref<108xf32, #tpu.memory_space<smem>>
    %310 = vector.broadcast %309 : f32 to vector<16x16xf32>
    %311 = arith.mulf %310, %285 : vector<16x16xf32>
    %312 = arith.addf %300, %311 : vector<16x16xf32>
    %c15_i32_52 = arith.constant 15 : i32
    %313 = tpu.dynamic_rotate %285 by %c15_i32_52 dim 1 : vector<16x16xf32>, i32 -> vector<16x16xf32>
    %cst_53 = arith.constant 0.000000e+00 : f32
    %314 = vector.broadcast %cst_53 : f32 to vector<16x16xf32>
    %315 = arith.select %9, %313, %314 : vector<16x16xi1>, vector<16x16xf32>
    %c20 = arith.constant 20 : index
    %316 = memref.load %arg2[%c20] : memref<108xf32, #tpu.memory_space<smem>>
    %317 = vector.broadcast %316 : f32 to vector<16x16xf32>
    %318 = arith.mulf %317, %315 : vector<16x16xf32>
    %319 = arith.addf %304, %318 : vector<16x16xf32>
    %c56 = arith.constant 56 : index
    %320 = memref.load %arg2[%c56] : memref<108xf32, #tpu.memory_space<smem>>
    %321 = vector.broadcast %320 : f32 to vector<16x16xf32>
    %322 = arith.mulf %321, %315 : vector<16x16xf32>
    %323 = arith.addf %308, %322 : vector<16x16xf32>
    %c92 = arith.constant 92 : index
    %324 = memref.load %arg2[%c92] : memref<108xf32, #tpu.memory_space<smem>>
    %325 = vector.broadcast %324 : f32 to vector<16x16xf32>
    %326 = arith.mulf %325, %315 : vector<16x16xf32>
    %327 = arith.addf %312, %326 : vector<16x16xf32>
    %c1_i32_54 = arith.constant 1 : i32
    %328 = tpu.dynamic_rotate %282 by %c1_i32_54 dim 1 : vector<16x16xf32>, i32 -> vector<16x16xf32>
    %cst_55 = arith.constant 0.000000e+00 : f32
    %329 = vector.broadcast %cst_55 : f32 to vector<16x16xf32>
    %330 = arith.select %7, %328, %329 : vector<16x16xi1>, vector<16x16xf32>
    %c21 = arith.constant 21 : index
    %331 = memref.load %arg2[%c21] : memref<108xf32, #tpu.memory_space<smem>>
    %332 = vector.broadcast %331 : f32 to vector<16x16xf32>
    %333 = arith.mulf %332, %330 : vector<16x16xf32>
    %334 = arith.addf %319, %333 : vector<16x16xf32>
    %c57 = arith.constant 57 : index
    %335 = memref.load %arg2[%c57] : memref<108xf32, #tpu.memory_space<smem>>
    %336 = vector.broadcast %335 : f32 to vector<16x16xf32>
    %337 = arith.mulf %336, %330 : vector<16x16xf32>
    %338 = arith.addf %323, %337 : vector<16x16xf32>
    %c93 = arith.constant 93 : index
    %339 = memref.load %arg2[%c93] : memref<108xf32, #tpu.memory_space<smem>>
    %340 = vector.broadcast %339 : f32 to vector<16x16xf32>
    %341 = arith.mulf %340, %330 : vector<16x16xf32>
    %342 = arith.addf %327, %341 : vector<16x16xf32>
    %c22 = arith.constant 22 : index
    %343 = memref.load %arg2[%c22] : memref<108xf32, #tpu.memory_space<smem>>
    %344 = vector.broadcast %343 : f32 to vector<16x16xf32>
    %345 = arith.mulf %344, %282 : vector<16x16xf32>
    %346 = arith.addf %334, %345 : vector<16x16xf32>
    %c58 = arith.constant 58 : index
    %347 = memref.load %arg2[%c58] : memref<108xf32, #tpu.memory_space<smem>>
    %348 = vector.broadcast %347 : f32 to vector<16x16xf32>
    %349 = arith.mulf %348, %282 : vector<16x16xf32>
    %350 = arith.addf %338, %349 : vector<16x16xf32>
    %c94 = arith.constant 94 : index
    %351 = memref.load %arg2[%c94] : memref<108xf32, #tpu.memory_space<smem>>
    %352 = vector.broadcast %351 : f32 to vector<16x16xf32>
    %353 = arith.mulf %352, %282 : vector<16x16xf32>
    %354 = arith.addf %342, %353 : vector<16x16xf32>
    %c15_i32_56 = arith.constant 15 : i32
    %355 = tpu.dynamic_rotate %282 by %c15_i32_56 dim 1 : vector<16x16xf32>, i32 -> vector<16x16xf32>
    %cst_57 = arith.constant 0.000000e+00 : f32
    %356 = vector.broadcast %cst_57 : f32 to vector<16x16xf32>
    %357 = arith.select %9, %355, %356 : vector<16x16xi1>, vector<16x16xf32>
    %c23 = arith.constant 23 : index
    %358 = memref.load %arg2[%c23] : memref<108xf32, #tpu.memory_space<smem>>
    %359 = vector.broadcast %358 : f32 to vector<16x16xf32>
    %360 = arith.mulf %359, %357 : vector<16x16xf32>
    %361 = arith.addf %346, %360 : vector<16x16xf32>
    %c59 = arith.constant 59 : index
    %362 = memref.load %arg2[%c59] : memref<108xf32, #tpu.memory_space<smem>>
    %363 = vector.broadcast %362 : f32 to vector<16x16xf32>
    %364 = arith.mulf %363, %357 : vector<16x16xf32>
    %365 = arith.addf %350, %364 : vector<16x16xf32>
    %c95 = arith.constant 95 : index
    %366 = memref.load %arg2[%c95] : memref<108xf32, #tpu.memory_space<smem>>
    %367 = vector.broadcast %366 : f32 to vector<16x16xf32>
    %368 = arith.mulf %367, %357 : vector<16x16xf32>
    %369 = arith.addf %354, %368 : vector<16x16xf32>
    %c15_i32_58 = arith.constant 15 : i32
    %370 = tpu.dynamic_rotate %282 by %c15_i32_58 dim 0 : vector<16x16xf32>, i32 -> vector<16x16xf32>
    %cst_59 = arith.constant 0.000000e+00 : f32
    %371 = vector.broadcast %cst_59 : f32 to vector<16x16xf32>
    %372 = arith.select %5, %370, %371 : vector<16x16xi1>, vector<16x16xf32>
    %c1_i32_60 = arith.constant 1 : i32
    %373 = tpu.dynamic_rotate %372 by %c1_i32_60 dim 1 : vector<16x16xf32>, i32 -> vector<16x16xf32>
    %cst_61 = arith.constant 0.000000e+00 : f32
    %374 = vector.broadcast %cst_61 : f32 to vector<16x16xf32>
    %375 = arith.select %7, %373, %374 : vector<16x16xi1>, vector<16x16xf32>
    %c24 = arith.constant 24 : index
    %376 = memref.load %arg2[%c24] : memref<108xf32, #tpu.memory_space<smem>>
    %377 = vector.broadcast %376 : f32 to vector<16x16xf32>
    %378 = arith.mulf %377, %375 : vector<16x16xf32>
    %379 = arith.addf %361, %378 : vector<16x16xf32>
    %c60 = arith.constant 60 : index
    %380 = memref.load %arg2[%c60] : memref<108xf32, #tpu.memory_space<smem>>
    %381 = vector.broadcast %380 : f32 to vector<16x16xf32>
    %382 = arith.mulf %381, %375 : vector<16x16xf32>
    %383 = arith.addf %365, %382 : vector<16x16xf32>
    %c96 = arith.constant 96 : index
    %384 = memref.load %arg2[%c96] : memref<108xf32, #tpu.memory_space<smem>>
    %385 = vector.broadcast %384 : f32 to vector<16x16xf32>
    %386 = arith.mulf %385, %375 : vector<16x16xf32>
    %387 = arith.addf %369, %386 : vector<16x16xf32>
    %c25 = arith.constant 25 : index
    %388 = memref.load %arg2[%c25] : memref<108xf32, #tpu.memory_space<smem>>
    %389 = vector.broadcast %388 : f32 to vector<16x16xf32>
    %390 = arith.mulf %389, %372 : vector<16x16xf32>
    %391 = arith.addf %379, %390 : vector<16x16xf32>
    %c61 = arith.constant 61 : index
    %392 = memref.load %arg2[%c61] : memref<108xf32, #tpu.memory_space<smem>>
    %393 = vector.broadcast %392 : f32 to vector<16x16xf32>
    %394 = arith.mulf %393, %372 : vector<16x16xf32>
    %395 = arith.addf %383, %394 : vector<16x16xf32>
    %c97 = arith.constant 97 : index
    %396 = memref.load %arg2[%c97] : memref<108xf32, #tpu.memory_space<smem>>
    %397 = vector.broadcast %396 : f32 to vector<16x16xf32>
    %398 = arith.mulf %397, %372 : vector<16x16xf32>
    %399 = arith.addf %387, %398 : vector<16x16xf32>
    %c15_i32_62 = arith.constant 15 : i32
    %400 = tpu.dynamic_rotate %372 by %c15_i32_62 dim 1 : vector<16x16xf32>, i32 -> vector<16x16xf32>
    %cst_63 = arith.constant 0.000000e+00 : f32
    %401 = vector.broadcast %cst_63 : f32 to vector<16x16xf32>
    %402 = arith.select %9, %400, %401 : vector<16x16xi1>, vector<16x16xf32>
    %c26 = arith.constant 26 : index
    %403 = memref.load %arg2[%c26] : memref<108xf32, #tpu.memory_space<smem>>
    %404 = vector.broadcast %403 : f32 to vector<16x16xf32>
    %405 = arith.mulf %404, %402 : vector<16x16xf32>
    %406 = arith.addf %391, %405 : vector<16x16xf32>
    %c62 = arith.constant 62 : index
    %407 = memref.load %arg2[%c62] : memref<108xf32, #tpu.memory_space<smem>>
    %408 = vector.broadcast %407 : f32 to vector<16x16xf32>
    %409 = arith.mulf %408, %402 : vector<16x16xf32>
    %410 = arith.addf %395, %409 : vector<16x16xf32>
    %c98 = arith.constant 98 : index
    %411 = memref.load %arg2[%c98] : memref<108xf32, #tpu.memory_space<smem>>
    %412 = vector.broadcast %411 : f32 to vector<16x16xf32>
    %413 = arith.mulf %412, %402 : vector<16x16xf32>
    %414 = arith.addf %399, %413 : vector<16x16xf32>
    %c0_64 = arith.constant 0 : index
    %c3_65 = arith.constant 3 : index
    %c0_66 = arith.constant 0 : index
    %c0_67 = arith.constant 0 : index
    %415 = vector.load %arg1[%c0_64, %c3_65, %c0_66, %c0_67] : memref<1x4x16x16xf32, #tpu.memory_space<vmem>>, vector<1x1x16x16xf32>
    %416 = vector.shape_cast %415 : vector<1x1x16x16xf32> to vector<16x16xf32>
    %c1_i32_68 = arith.constant 1 : i32
    %417 = tpu.dynamic_rotate %416 by %c1_i32_68 dim 0 : vector<16x16xf32>, i32 -> vector<16x16xf32>
    %cst_69 = arith.constant 0.000000e+00 : f32
    %418 = vector.broadcast %cst_69 : f32 to vector<16x16xf32>
    %419 = arith.select %3, %417, %418 : vector<16x16xi1>, vector<16x16xf32>
    %c1_i32_70 = arith.constant 1 : i32
    %420 = tpu.dynamic_rotate %419 by %c1_i32_70 dim 1 : vector<16x16xf32>, i32 -> vector<16x16xf32>
    %cst_71 = arith.constant 0.000000e+00 : f32
    %421 = vector.broadcast %cst_71 : f32 to vector<16x16xf32>
    %422 = arith.select %7, %420, %421 : vector<16x16xi1>, vector<16x16xf32>
    %c27 = arith.constant 27 : index
    %423 = memref.load %arg2[%c27] : memref<108xf32, #tpu.memory_space<smem>>
    %424 = vector.broadcast %423 : f32 to vector<16x16xf32>
    %425 = arith.mulf %424, %422 : vector<16x16xf32>
    %426 = arith.addf %406, %425 : vector<16x16xf32>
    %c63 = arith.constant 63 : index
    %427 = memref.load %arg2[%c63] : memref<108xf32, #tpu.memory_space<smem>>
    %428 = vector.broadcast %427 : f32 to vector<16x16xf32>
    %429 = arith.mulf %428, %422 : vector<16x16xf32>
    %430 = arith.addf %410, %429 : vector<16x16xf32>
    %c99 = arith.constant 99 : index
    %431 = memref.load %arg2[%c99] : memref<108xf32, #tpu.memory_space<smem>>
    %432 = vector.broadcast %431 : f32 to vector<16x16xf32>
    %433 = arith.mulf %432, %422 : vector<16x16xf32>
    %434 = arith.addf %414, %433 : vector<16x16xf32>
    %c28 = arith.constant 28 : index
    %435 = memref.load %arg2[%c28] : memref<108xf32, #tpu.memory_space<smem>>
    %436 = vector.broadcast %435 : f32 to vector<16x16xf32>
    %437 = arith.mulf %436, %419 : vector<16x16xf32>
    %438 = arith.addf %426, %437 : vector<16x16xf32>
    %c64 = arith.constant 64 : index
    %439 = memref.load %arg2[%c64] : memref<108xf32, #tpu.memory_space<smem>>
    %440 = vector.broadcast %439 : f32 to vector<16x16xf32>
    %441 = arith.mulf %440, %419 : vector<16x16xf32>
    %442 = arith.addf %430, %441 : vector<16x16xf32>
    %c100 = arith.constant 100 : index
    %443 = memref.load %arg2[%c100] : memref<108xf32, #tpu.memory_space<smem>>
    %444 = vector.broadcast %443 : f32 to vector<16x16xf32>
    %445 = arith.mulf %444, %419 : vector<16x16xf32>
    %446 = arith.addf %434, %445 : vector<16x16xf32>
    %c15_i32_72 = arith.constant 15 : i32
    %447 = tpu.dynamic_rotate %419 by %c15_i32_72 dim 1 : vector<16x16xf32>, i32 -> vector<16x16xf32>
    %cst_73 = arith.constant 0.000000e+00 : f32
    %448 = vector.broadcast %cst_73 : f32 to vector<16x16xf32>
    %449 = arith.select %9, %447, %448 : vector<16x16xi1>, vector<16x16xf32>
    %c29 = arith.constant 29 : index
    %450 = memref.load %arg2[%c29] : memref<108xf32, #tpu.memory_space<smem>>
    %451 = vector.broadcast %450 : f32 to vector<16x16xf32>
    %452 = arith.mulf %451, %449 : vector<16x16xf32>
    %453 = arith.addf %438, %452 : vector<16x16xf32>
    %c65 = arith.constant 65 : index
    %454 = memref.load %arg2[%c65] : memref<108xf32, #tpu.memory_space<smem>>
    %455 = vector.broadcast %454 : f32 to vector<16x16xf32>
    %456 = arith.mulf %455, %449 : vector<16x16xf32>
    %457 = arith.addf %442, %456 : vector<16x16xf32>
    %c101 = arith.constant 101 : index
    %458 = memref.load %arg2[%c101] : memref<108xf32, #tpu.memory_space<smem>>
    %459 = vector.broadcast %458 : f32 to vector<16x16xf32>
    %460 = arith.mulf %459, %449 : vector<16x16xf32>
    %461 = arith.addf %446, %460 : vector<16x16xf32>
    %c1_i32_74 = arith.constant 1 : i32
    %462 = tpu.dynamic_rotate %416 by %c1_i32_74 dim 1 : vector<16x16xf32>, i32 -> vector<16x16xf32>
    %cst_75 = arith.constant 0.000000e+00 : f32
    %463 = vector.broadcast %cst_75 : f32 to vector<16x16xf32>
    %464 = arith.select %7, %462, %463 : vector<16x16xi1>, vector<16x16xf32>
    %c30 = arith.constant 30 : index
    %465 = memref.load %arg2[%c30] : memref<108xf32, #tpu.memory_space<smem>>
    %466 = vector.broadcast %465 : f32 to vector<16x16xf32>
    %467 = arith.mulf %466, %464 : vector<16x16xf32>
    %468 = arith.addf %453, %467 : vector<16x16xf32>
    %c66 = arith.constant 66 : index
    %469 = memref.load %arg2[%c66] : memref<108xf32, #tpu.memory_space<smem>>
    %470 = vector.broadcast %469 : f32 to vector<16x16xf32>
    %471 = arith.mulf %470, %464 : vector<16x16xf32>
    %472 = arith.addf %457, %471 : vector<16x16xf32>
    %c102 = arith.constant 102 : index
    %473 = memref.load %arg2[%c102] : memref<108xf32, #tpu.memory_space<smem>>
    %474 = vector.broadcast %473 : f32 to vector<16x16xf32>
    %475 = arith.mulf %474, %464 : vector<16x16xf32>
    %476 = arith.addf %461, %475 : vector<16x16xf32>
    %c31 = arith.constant 31 : index
    %477 = memref.load %arg2[%c31] : memref<108xf32, #tpu.memory_space<smem>>
    %478 = vector.broadcast %477 : f32 to vector<16x16xf32>
    %479 = arith.mulf %478, %416 : vector<16x16xf32>
    %480 = arith.addf %468, %479 : vector<16x16xf32>
    %c67 = arith.constant 67 : index
    %481 = memref.load %arg2[%c67] : memref<108xf32, #tpu.memory_space<smem>>
    %482 = vector.broadcast %481 : f32 to vector<16x16xf32>
    %483 = arith.mulf %482, %416 : vector<16x16xf32>
    %484 = arith.addf %472, %483 : vector<16x16xf32>
    %c103 = arith.constant 103 : index
    %485 = memref.load %arg2[%c103] : memref<108xf32, #tpu.memory_space<smem>>
    %486 = vector.broadcast %485 : f32 to vector<16x16xf32>
    %487 = arith.mulf %486, %416 : vector<16x16xf32>
    %488 = arith.addf %476, %487 : vector<16x16xf32>
    %c15_i32_76 = arith.constant 15 : i32
    %489 = tpu.dynamic_rotate %416 by %c15_i32_76 dim 1 : vector<16x16xf32>, i32 -> vector<16x16xf32>
    %cst_77 = arith.constant 0.000000e+00 : f32
    %490 = vector.broadcast %cst_77 : f32 to vector<16x16xf32>
    %491 = arith.select %9, %489, %490 : vector<16x16xi1>, vector<16x16xf32>
    %c32 = arith.constant 32 : index
    %492 = memref.load %arg2[%c32] : memref<108xf32, #tpu.memory_space<smem>>
    %493 = vector.broadcast %492 : f32 to vector<16x16xf32>
    %494 = arith.mulf %493, %491 : vector<16x16xf32>
    %495 = arith.addf %480, %494 : vector<16x16xf32>
    %c68 = arith.constant 68 : index
    %496 = memref.load %arg2[%c68] : memref<108xf32, #tpu.memory_space<smem>>
    %497 = vector.broadcast %496 : f32 to vector<16x16xf32>
    %498 = arith.mulf %497, %491 : vector<16x16xf32>
    %499 = arith.addf %484, %498 : vector<16x16xf32>
    %c104 = arith.constant 104 : index
    %500 = memref.load %arg2[%c104] : memref<108xf32, #tpu.memory_space<smem>>
    %501 = vector.broadcast %500 : f32 to vector<16x16xf32>
    %502 = arith.mulf %501, %491 : vector<16x16xf32>
    %503 = arith.addf %488, %502 : vector<16x16xf32>
    %c15_i32_78 = arith.constant 15 : i32
    %504 = tpu.dynamic_rotate %416 by %c15_i32_78 dim 0 : vector<16x16xf32>, i32 -> vector<16x16xf32>
    %cst_79 = arith.constant 0.000000e+00 : f32
    %505 = vector.broadcast %cst_79 : f32 to vector<16x16xf32>
    %506 = arith.select %5, %504, %505 : vector<16x16xi1>, vector<16x16xf32>
    %c1_i32_80 = arith.constant 1 : i32
    %507 = tpu.dynamic_rotate %506 by %c1_i32_80 dim 1 : vector<16x16xf32>, i32 -> vector<16x16xf32>
    %cst_81 = arith.constant 0.000000e+00 : f32
    %508 = vector.broadcast %cst_81 : f32 to vector<16x16xf32>
    %509 = arith.select %7, %507, %508 : vector<16x16xi1>, vector<16x16xf32>
    %c33 = arith.constant 33 : index
    %510 = memref.load %arg2[%c33] : memref<108xf32, #tpu.memory_space<smem>>
    %511 = vector.broadcast %510 : f32 to vector<16x16xf32>
    %512 = arith.mulf %511, %509 : vector<16x16xf32>
    %513 = arith.addf %495, %512 : vector<16x16xf32>
    %c69 = arith.constant 69 : index
    %514 = memref.load %arg2[%c69] : memref<108xf32, #tpu.memory_space<smem>>
    %515 = vector.broadcast %514 : f32 to vector<16x16xf32>
    %516 = arith.mulf %515, %509 : vector<16x16xf32>
    %517 = arith.addf %499, %516 : vector<16x16xf32>
    %c105 = arith.constant 105 : index
    %518 = memref.load %arg2[%c105] : memref<108xf32, #tpu.memory_space<smem>>
    %519 = vector.broadcast %518 : f32 to vector<16x16xf32>
    %520 = arith.mulf %519, %509 : vector<16x16xf32>
    %521 = arith.addf %503, %520 : vector<16x16xf32>
    %c34 = arith.constant 34 : index
    %522 = memref.load %arg2[%c34] : memref<108xf32, #tpu.memory_space<smem>>
    %523 = vector.broadcast %522 : f32 to vector<16x16xf32>
    %524 = arith.mulf %523, %506 : vector<16x16xf32>
    %525 = arith.addf %513, %524 : vector<16x16xf32>
    %c70 = arith.constant 70 : index
    %526 = memref.load %arg2[%c70] : memref<108xf32, #tpu.memory_space<smem>>
    %527 = vector.broadcast %526 : f32 to vector<16x16xf32>
    %528 = arith.mulf %527, %506 : vector<16x16xf32>
    %529 = arith.addf %517, %528 : vector<16x16xf32>
    %c106 = arith.constant 106 : index
    %530 = memref.load %arg2[%c106] : memref<108xf32, #tpu.memory_space<smem>>
    %531 = vector.broadcast %530 : f32 to vector<16x16xf32>
    %532 = arith.mulf %531, %506 : vector<16x16xf32>
    %533 = arith.addf %521, %532 : vector<16x16xf32>
    %c15_i32_82 = arith.constant 15 : i32
    %534 = tpu.dynamic_rotate %506 by %c15_i32_82 dim 1 : vector<16x16xf32>, i32 -> vector<16x16xf32>
    %cst_83 = arith.constant 0.000000e+00 : f32
    %535 = vector.broadcast %cst_83 : f32 to vector<16x16xf32>
    %536 = arith.select %9, %534, %535 : vector<16x16xi1>, vector<16x16xf32>
    %c35 = arith.constant 35 : index
    %537 = memref.load %arg2[%c35] : memref<108xf32, #tpu.memory_space<smem>>
    %538 = vector.broadcast %537 : f32 to vector<16x16xf32>
    %539 = arith.mulf %538, %536 : vector<16x16xf32>
    %540 = arith.addf %525, %539 : vector<16x16xf32>
    %c71 = arith.constant 71 : index
    %541 = memref.load %arg2[%c71] : memref<108xf32, #tpu.memory_space<smem>>
    %542 = vector.broadcast %541 : f32 to vector<16x16xf32>
    %543 = arith.mulf %542, %536 : vector<16x16xf32>
    %544 = arith.addf %529, %543 : vector<16x16xf32>
    %c107 = arith.constant 107 : index
    %545 = memref.load %arg2[%c107] : memref<108xf32, #tpu.memory_space<smem>>
    %546 = vector.broadcast %545 : f32 to vector<16x16xf32>
    %547 = arith.mulf %546, %536 : vector<16x16xf32>
    %548 = arith.addf %533, %547 : vector<16x16xf32>
    %c0_84 = arith.constant 0 : index
    %549 = memref.load %arg3[%c0_84] : memref<3xf32, #tpu.memory_space<smem>>
    %550 = vector.broadcast %549 : f32 to vector<16x16xf32>
    %551 = arith.addf %540, %550 : vector<16x16xf32>
    %552 = math.tanh %551 : vector<16x16xf32>
    %c0_85 = arith.constant 0 : index
    %c0_86 = arith.constant 0 : index
    %c0_87 = arith.constant 0 : index
    %c0_88 = arith.constant 0 : index
    %553 = vector.load %arg4[%c0_85, %c0_86, %c0_87, %c0_88] : memref<1x3x16x16xf32, #tpu.memory_space<vmem>>, vector<1x1x16x16xf32>
    %554 = vector.shape_cast %553 : vector<1x1x16x16xf32> to vector<16x16xf32>
    %555 = vector.shape_cast %552 : vector<16x16xf32> to vector<1x1x16x16xf32>
    tpu.vector_store %arg4[%c0_85, %c0_86, %c0_87, %c0_88], %555 {strides = array<i32>} : memref<1x3x16x16xf32, #tpu.memory_space<vmem>>, vector<1x1x16x16xf32>,
    %c1_89 = arith.constant 1 : index
    %556 = memref.load %arg3[%c1_89] : memref<3xf32, #tpu.memory_space<smem>>
    %557 = vector.broadcast %556 : f32 to vector<16x16xf32>
    %558 = arith.addf %544, %557 : vector<16x16xf32>
    %559 = math.tanh %558 : vector<16x16xf32>
    %c0_90 = arith.constant 0 : index
    %c1_91 = arith.constant 1 : index
    %c0_92 = arith.constant 0 : index
    %c0_93 = arith.constant 0 : index
    %560 = vector.load %arg4[%c0_90, %c1_91, %c0_92, %c0_93] : memref<1x3x16x16xf32, #tpu.memory_space<vmem>>, vector<1x1x16x16xf32>
    %561 = vector.shape_cast %560 : vector<1x1x16x16xf32> to vector<16x16xf32>
    %562 = vector.shape_cast %559 : vector<16x16xf32> to vector<1x1x16x16xf32>
    tpu.vector_store %arg4[%c0_90, %c1_91, %c0_92, %c0_93], %562 {strides = array<i32>} : memref<1x3x16x16xf32, #tpu.memory_space<vmem>>, vector<1x1x16x16xf32>,
    %c2_94 = arith.constant 2 : index
    %563 = memref.load %arg3[%c2_94] : memref<3xf32, #tpu.memory_space<smem>>
    %564 = vector.broadcast %563 : f32 to vector<16x16xf32>
    %565 = arith.addf %548, %564 : vector<16x16xf32>
    %566 = math.tanh %565 : vector<16x16xf32>
    %c0_95 = arith.constant 0 : index
    %c2_96 = arith.constant 2 : index
    %c0_97 = arith.constant 0 : index
    %c0_98 = arith.constant 0 : index
    %567 = vector.load %arg4[%c0_95, %c2_96, %c0_97, %c0_98] : memref<1x3x16x16xf32, #tpu.memory_space<vmem>>, vector<1x1x16x16xf32>
    %568 = vector.shape_cast %567 : vector<1x1x16x16xf32> to vector<16x16xf32>
    %569 = vector.shape_cast %566 : vector<16x16xf32> to vector<1x1x16x16xf32>
    tpu.vector_store %arg4[%c0_95, %c2_96, %c0_97, %c0_98], %569 {strides = array<i32>} : memref<1x3x16x16xf32, #tpu.memory_space<vmem>>, vector<1x1x16x16xf32>,
    return
  }
  func.func @transform_0(%arg0: i32) -> (i32, i32, i32, i32) {
    %c0_i32 = arith.constant 0 : i32
    %c0_i32_0 = arith.constant 0 : i32
    %c0_i32_1 = arith.constant 0 : i32
    %c0_i32_2 = arith.constant 0 : i32
    return %arg0, %c0_i32, %c0_i32_0, %c0_i32_1 : i32, i32, i32, i32
  }
  func.func @transform_1(%arg0: i32) -> i32 {
    %c0_i32 = arith.constant 0 : i32
    %c0_i32_0 = arith.constant 0 : i32
    return %c0_i32 : i32
  }
  func.func @transform_2(%arg0: i32) -> i32 {
    %c0_i32 = arith.constant 0 : i32
    %c0_i32_0 = arith.constant 0 : i32
    return %c0_i32 : i32
  }
  func.func @transform_3(%arg0: i32) -> (i32, i32, i32, i32) {
    %c0_i32 = arith.constant 0 : i32
    %c0_i32_0 = arith.constant 0 : i32
    %c0_i32_1 = arith.constant 0 : i32
    %c0_i32_2 = arith.constant 0 : i32
    return %arg0, %c0_i32, %c0_i32_0, %c0_i32_1 : i32, i32, i32, i32
  }
}

</mosaic_0001>

<llo_original>
// kernel: tpu_custom_call.1
$region0: #{tpu_custom_call.1}
  #allocation0 [shape = 'u32[]', space=smem, size = 0x4, offset = 0x4, fixed_abs, tag = 'smem constant byte address 0x4 - core index']
  #allocation1 [shape = 'u32[144,128]{1,0:T(1,128)}', space=vmem, size = 0x12000, scoped, tag = 'internal scratch']
  %s0 = inlined_call_operand.hbm [shape: f32[2,4,16,16], index: 0, kind: input, shape index: {}]
  %s1 = inlined_call_operand.vmem [shape: f32[108], index: 1, kind: input, shape index: {}]
  %s2 = inlined_call_operand.vmem [shape: f32[3], index: 2, kind: input, shape index: {}]
  %s3 = inlined_call_operand.hbm [shape: f32[2,3,16,16], index: 3, kind: output, shape index: {}]
  %s4 = sld [smem:[#allocation0]]
  $region57: #{tpu_custom_call.1} parent=0
    _
  %s6 = ssub.s32 1, %s4
  %s7 = scalar_select 0, %s6, %s4
  $region1: #{tpu_custom_call.1} parent=0
    #allocation2 [shape = 'u8[65536]{0}', space=vmem, size = 0x10000, scoped, tag = 'input window, operand 0']
    #allocation3 [shape = 's32[2]{0}', space=sflag, size = 0x8, scoped, tag = 'scoped memory for tpu_custom_call.1']
    #allocation4 [shape = 's32[2]{0}', space=sflag, size = 0x8, scoped, tag = 'scoped memory for tpu_custom_call.1']
    #allocation5 [shape = 's32[2]{0}', space=sflag, size = 0x8, scoped, tag = 'scoped memory for tpu_custom_call.1']
    #allocation6 [shape = 'u8[512]{0}', space=smem, size = 0x200, scoped, tag = 'input window, operand 1, single buffered']
    #allocation7 [shape = 'u8[512]{0}', space=smem, size = 0x200, scoped, tag = 'input window, operand 2, single buffered']
    #allocation8 [shape = 's32[1]{0}', space=sflag, size = 0x4, scoped, tag = 'scoped memory for tpu_custom_call.1']
    #allocation9 [shape = 'u8[49152]{0}', space=vmem, size = 0xc000, scoped, tag = 'output window, operand 0']
    %8 = vsyncpa [#allocation3], 0
    %s9 = scalar_lea.sflag [#allocation3], 1
    %10 = vsyncpa %s9, 0
    %11 = vsyncpa [#allocation5], 0
    %12 = vsyncpa [#allocation8], 0
    %13 = vsyncpa [#allocation4], 0
    %s14 = scalar_lea.sflag [#allocation4], 1
    %15 = vsyncpa %s14, 0
    loop: start=0, step=1, limit=4
    $region2: #{tpu_custom_call.1} parent=1 // loop_pre_header
      _
    $region3: #{tpu_custom_call.1} parent=1 // loop_header
      %s17 = sphi 0, %s21
      %p18 = scmp.ge.s32.totalorder %s17, 4
      %s27 = sphi 0, %s29
      %s30 = sphi 0, %s27
      %s31 = sphi 0, %s30
      %s47 = sphi 0, %s31
      %s51 = sphi 0, %s51
      %s53 = sphi 0, %s51
      %s54 = sphi 0, %s53
      %s68 = sphi 0, %s54
      %s72 = sphi 0, %s72
      %s74 = sphi 0, %s72
      %s75 = sphi 0, %s74
      %s89 = sphi 0, %s75
      %s95 = sphi 0, %s97
      %s98 = sphi 0, %s95
      %s99 = sphi 0, %s98
      %s115 = sphi 0, %s99
    $region4: #{tpu_custom_call.1} parent=1 // loop_header_branch
      %20 = sbr.rel (%p18) target = $region8
    $region5: #{tpu_custom_call.1} parent=1 // loop_body
      %s22 = ssub.s32 %s17, 1
      %s23 = ssub.s32 %s17, 2
      %s24 = sadd.s32 %s17, 1
      %s25 = ssub.s32 %s17, %s24
      %p26 = scmp.eq.s32.totalorder %s25, 0
      %s28 = sadd.s32 %s27, 1
      %s29 = scalar_select %p26, %s27, %s28
      %p32 = pneg %p26
      %p33 = scmp.eq.s32.totalorder %s17, 1
      %p34 = por %p32, %p33
      %p35 = scmp.ne.s32.totalorder %s27, %s30
      %p36 = scmp.eq.s32.totalorder %s17, 0
      %p37 = por %p35, %p36
      %p38 = scmp.ne.s32.totalorder %s27, %s30
      %p39 = scmp.eq.s32.totalorder %s22, 1
      %p40 = por %p38, %p39
      %p41 = scmp.ne.s32.totalorder %s30, %s31
      %p42 = scmp.eq.s32.totalorder %s22, 0
      %p43 = por %p41, %p42
      %p44 = scmp.ne.s32.totalorder %s30, %s31
      %p45 = scmp.eq.s32.totalorder %s23, 1
      %p46 = por %p44, %p45
      %p48 = scmp.ne.s32.totalorder %s31, %s47
      %p49 = scmp.eq.s32.totalorder %s23, 0
      %p50 = por %p48, %p49
      %s52 = sadd.s32 %s51, 1
      %p55 = scmp.eq.s32.totalorder %s17, 1
      %p56 = scmp.ne.s32.totalorder %s51, %s53
      %p57 = scmp.eq.s32.totalorder %s17, 0
      %p58 = por %p56, %p57
      %p59 = scmp.ne.s32.totalorder %s51, %s53
      %p60 = scmp.eq.s32.totalorder %s22, 1
      %p61 = por %p59, %p60
      %p62 = scmp.ne.s32.totalorder %s53, %s54
      %p63 = scmp.eq.s32.totalorder %s22, 0
      %p64 = por %p62, %p63
      %p65 = scmp.ne.s32.totalorder %s53, %s54
      %p66 = scmp.eq.s32.totalorder %s23, 1
      %p67 = por %p65, %p66
      %p69 = scmp.ne.s32.totalorder %s54, %s68
      %p70 = scmp.eq.s32.totalorder %s23, 0
      %p71 = por %p69, %p70
      %s73 = sadd.s32 %s72, 1
      %p76 = scmp.eq.s32.totalorder %s17, 1
      %p77 = scmp.ne.s32.totalorder %s72, %s74
      %p78 = scmp.eq.s32.totalorder %s17, 0
      %p79 = por %p77, %p78
      %p80 = scmp.ne.s32.totalorder %s72, %s74
      %p81 = scmp.eq.s32.totalorder %s22, 1
      %p82 = por %p80, %p81
      %p83 = scmp.ne.s32.totalorder %s74, %s75
      %p84 = scmp.eq.s32.totalorder %s22, 0
      %p85 = por %p83, %p84
      %p86 = scmp.ne.s32.totalorder %s74, %s75
      %p87 = scmp.eq.s32.totalorder %s23, 1
      %p88 = por %p86, %p87
      %p90 = scmp.ne.s32.totalorder %s75, %s89
      %p91 = scmp.eq.s32.totalorder %s23, 0
      %p92 = por %p90, %p91
      %s93 = ssub.s32 %s17, %s24
      %p94 = scmp.eq.s32.totalorder %s93, 0
      %s96 = sadd.s32 %s95, 1
      %s97 = scalar_select %p94, %s95, %s96
      %p100 = pneg %p94
      %p101 = scmp.eq.s32.totalorder %s17, 1
      %p102 = por %p100, %p101
      %p103 = scmp.ne.s32.totalorder %s95, %s98
      %p104 = scmp.eq.s32.totalorder %s17, 0
      %p105 = por %p103, %p104
      %p106 = scmp.ne.s32.totalorder %s95, %s98
      %p107 = scmp.eq.s32.totalorder %s22, 1
      %p108 = por %p106, %p107
      %p109 = scmp.ne.s32.totalorder %s98, %s99
      %p110 = scmp.eq.s32.totalorder %s22, 0
      %p111 = por %p109, %p110
      %p112 = scmp.ne.s32.totalorder %s98, %s99
      %p113 = scmp.eq.s32.totalorder %s23, 1
      %p114 = por %p112, %p113
      %p116 = scmp.ne.s32.totalorder %s99, %s115
      %p117 = scmp.eq.s32.totalorder %s23, 0
      %p118 = por %p116, %p117
      %p119 = scmp.le.s32.totalorder 1, %s17
      %p120 = scmp.lt.s32.totalorder %s17, 3
      %p121 = pnand %p119, %p120
      %p122 = pneg %p121
      // Predicated region
      $region9: #{tpu_custom_call.1} parent=5 // pred_check
        _
      $region10: #{tpu_custom_call.1} parent=5 // pred_check_branch
        %124 = sbr.rel (%p121) target = $region12
      $region11: #{tpu_custom_call.1} parent=5 // pred_region
        %s125 = ssub.s32 %s17, 1
        // Predicated region
        $region13: #{tpu_custom_call.1} parent=11 // pred_check
          %p126 = pneg %p64
        $region14: #{tpu_custom_call.1} parent=11 // pred_check_branch
          %128 = sbr.rel (%p126) target = $region16
        $region15: #{tpu_custom_call.1} parent=11 // pred_region
          %s130 = ssub.s32 16, 16
          %131 = vsyncadd [#allocation5], %s130
          %s133 = sshll.u32 %s1, 4
          %s134 = int_to_ptr.vmem [resolvable:$true] %s133
          %136 = dma.vmem_to_smem %s134, 16, [#allocation6], [#allocation5]
        $region16: #{tpu_custom_call.1} parent=11 // pred_fallthru
          _
        // Predicated region
        $region17: #{tpu_custom_call.1} parent=11 // pred_check
          %p137 = pneg %p85
        $region18: #{tpu_custom_call.1} parent=11 // pred_check_branch
          %139 = sbr.rel (%p137) target = $region20
        $region19: #{tpu_custom_call.1} parent=11 // pred_region
          %s141 = ssub.s32 16, 16
          %142 = vsyncadd [#allocation8], %s141
          %s144 = sshll.u32 %s2, 4
          %s145 = int_to_ptr.vmem [resolvable:$true] %s144
          %147 = dma.vmem_to_smem %s145, 16, [#allocation7], [#allocation8]
        $region20: #{tpu_custom_call.1} parent=11 // pred_fallthru
          _
      $region12: #{tpu_custom_call.1} parent=5 // pred_fallthru
        _
      %p148 = scmp.lt.s32.totalorder %s17, 2
      // Predicated region
      $region21: #{tpu_custom_call.1} parent=5 // pred_check
        %p149 = pneg %p148
      $region22: #{tpu_custom_call.1} parent=5 // pred_check_branch
        %151 = sbr.rel (%p149) target = $region24
      $region23: #{tpu_custom_call.1} parent=5 // pred_region
        // Predicated region
        $region25: #{tpu_custom_call.1} parent=23 // pred_check
          %p152 = pneg %p37
        $region26: #{tpu_custom_call.1} parent=23 // pred_check_branch
          %154 = sbr.rel (%p152) target = $region28
        $region27: #{tpu_custom_call.1} parent=23 // pred_region
          %s155 = sand.u32 %s27, 1
          %s156 = scalar_lea.sflag [#allocation3], %s155
          %s157 = sand.u32 %s27, 1
          %s158 = smul.addr %s157, 64
          %s159 = scalar_lea.vmem [#allocation2], %s158
          %s161 = ssub.s32 1024, 1024
          %162 = vsyncadd %s156, %s161
          %s163 = smul.addr %s17, 8
          %s164 = smul.addr %s163, 128
          %s165 = scalar_lea.hbm %s0, %s164
          %s166 = sshll.u32 %s159, 4
          %s167 = int_to_ptr.vmem [resolvable:$true] %s166
          %172 = dma.hbm_to_vmem [thread:$0]  %s165, 1024, %s167, %s156, 128, 128, 8
        $region28: #{tpu_custom_call.1} parent=23 // pred_fallthru
          _
      $region24: #{tpu_custom_call.1} parent=5 // pred_fallthru
        _
      %p173 = scmp.le.s32.totalorder 1, %s17
      %p174 = scmp.lt.s32.totalorder %s17, 3
      %p175 = pnand %p173, %p174
      %p176 = pneg %p175
      // Predicated region
      $region29: #{tpu_custom_call.1} parent=5 // pred_check
        _
      $region30: #{tpu_custom_call.1} parent=5 // pred_check_branch
        %178 = sbr.rel (%p175) target = $region32
      $region31: #{tpu_custom_call.1} parent=5 // pred_region
        %s179 = ssub.s32 %s17, 1
        %s180 = sand.u32 %s30, 1
        %s181 = scalar_lea.sflag [#allocation3], %s180
        %s182 = sand.u32 %s30, 1
        %s183 = smul.addr %s182, 64
        %s184 = scalar_lea.vmem [#allocation2], %s183
        // Predicated region
        $region33: #{tpu_custom_call.1} parent=31 // pred_check
          %p185 = pneg %p43
        $region34: #{tpu_custom_call.1} parent=31 // pred_check_branch
          %187 = sbr.rel (%p185) target = $region36
        $region35: #{tpu_custom_call.1} parent=31 // pred_region
          %188 = dma.done %s181, 1024
        $region36: #{tpu_custom_call.1} parent=31 // pred_fallthru
          _
        // Predicated region
        $region37: #{tpu_custom_call.1} parent=31 // pred_check
          %p189 = pneg %p64
        $region38: #{tpu_custom_call.1} parent=31 // pred_check_branch
          %191 = sbr.rel (%p189) target = $region40
        $region39: #{tpu_custom_call.1} parent=31 // pred_region
          %192 = dma.done [#allocation5], 16
        $region40: #{tpu_custom_call.1} parent=31 // pred_fallthru
          _
        // Predicated region
        $region41: #{tpu_custom_call.1} parent=31 // pred_check
          %p193 = pneg %p85
        $region42: #{tpu_custom_call.1} parent=31 // pred_check_branch
          %195 = sbr.rel (%p193) target = $region44
        $region43: #{tpu_custom_call.1} parent=31 // pred_region
          %196 = dma.done [#allocation8], 16
        $region44: #{tpu_custom_call.1} parent=31 // pred_fallthru
          _
        %197 = sfence
        %s198 = sand.u32 %s30, 1
        %s199 = scalar_lea.sflag [#allocation3], %s198
        %s200 = sand.u32 %s30, 1
        %s201 = smul.addr %s200, 64
        %s202 = scalar_lea.vmem [#allocation2], %s201
        %p203 = pneg %p43
        %p204 = pneg %p40
        %p205 = pneg %p64
        %p206 = pneg %p61
        %p207 = pneg %p85
        %p208 = pneg %p82
        %p209 = pneg %p111
        %p210 = pneg %p108
        %s211 = sand.u32 %s98, 1
        %s212 = scalar_lea.sflag [#allocation4], %s211
        %s213 = sand.u32 %s98, 1
        %s214 = smul.addr %s213, 48
        %s215 = scalar_lea.vmem [#allocation9], %s214
        %v216 = vlaneseq
        %v217 = vshrl.u32 %v216, 7
        %v218 = vadd.s32 %v217, 8
        %v219 = vlaneseq
        %v220 = vand.u32 %v219, 127
        %vm221 = vcmp.ge.s32.totalorder %v217, 1
        %vm222 = vcmp.ge.s32.totalorder %v218, 1
        %vm223 = vcmp.lt.s32.totalorder %v217, 15
        %vm224 = vcmp.lt.s32.totalorder %v218, 15
        %vm225 = vcmp.ge.s32.totalorder %v220, 1
        %vm226 = vcmp.lt.s32.totalorder %v220, 15
        %v227 = vld [vmem:[%s184] sm:$0xff]
        %v228 = vld [vmem:[%s184 + $0x8] sm:$0xff]
        %v229 = vrot.slane %v227, 7
        %v230 = vrot.slane %v228, 7
        %vm231 = vcmp.lt.s32.totalorder %v217, 1
        %v232 = vsel %vm231, %v229, %v230
        %v233 = vsel %vm231, %v230, %v229
        %v234 = vsel %vm221, %v233, 0.0
        %v235 = vsel %vm222, %v232, 0.0
        %vm236 = vcmask 1047680
        %237 = vrot.lane.b32.xlu0 %v234, 16
        %v238 = vpop.permute.xlu0 %237
        %v239 = vsel %vm236, %v238, %v234
        %240 = vrot.lane.b32.xlu0 %v235, 16
        %v241 = vpop.permute.xlu0 %240
        %v242 = vsel %vm236, %v241, %v235
        %243 = vrot.lane.b32.xlu0 %v239, 16
        %v244 = vpop.permute.xlu0 %243
        %245 = vrot.lane.b32.xlu0 %v242, 16
        %v246 = vpop.permute.xlu0 %245
        %v247 = vsel %vm236, %v244, %v234
        %v248 = vsel %vm236, %v246, %v235
        %251 = vrot.lane.b32.xlu0 %v247, 113
        %v252 = vpop.permute.xlu0 %251
        %253 = vrot.lane.b32.xlu0 %v248, 113
        %v254 = vpop.permute.xlu0 %253
        %v257 = vsel %vm225, %v252, 0.0
        %v258 = vsel %vm225, %v254, 0.0
        %s259 = sld [smem:[#allocation6]]
        %v260 = vstv %s259
        %v261 = vmul.f32 %v260, %v257
        %v262 = vmul.f32 %v260, %v258
        %v263 = vadd.f32 %v261, 0.0
        %v264 = vadd.f32 %v262, 0.0
        %s265 = sld [smem:[#allocation6 + $0x24]]
        %v266 = vstv %s265
        %v267 = vmul.f32 %v266, %v257
        %v268 = vmul.f32 %v266, %v258
        %v269 = vadd.f32 %v267, 0.0
        %v270 = vadd.f32 %v268, 0.0
        %s271 = sld [smem:[#allocation6 + $0x48]]
        %v272 = vstv %s271
        %v273 = vmul.f32 %v272, %v257
        %v274 = vmul.f32 %v272, %v258
        %v275 = vadd.f32 %v273, 0.0
        %v276 = vadd.f32 %v274, 0.0
        %s277 = sld [smem:[#allocation6 + $0x1]]
        %v278 = vstv %s277
        %v279 = vmul.f32 %v278, %v234
        %v280 = vmul.f32 %v278, %v235
        %v281 = vadd.f32 %v263, %v279
        %v282 = vadd.f32 %v264, %v280
        %s283 = sld [smem:[#allocation6 + $0x25]]
        %v284 = vstv %s283
        %v285 = vmul.f32 %v284, %v234
        %v286 = vmul.f32 %v284, %v235
        %v287 = vadd.f32 %v269, %v285
        %v288 = vadd.f32 %v270, %v286
        %s289 = sld [smem:[#allocation6 + $0x49]]
        %v290 = vstv %s289
        %v291 = vmul.f32 %v290, %v234
        %v292 = vmul.f32 %v290, %v235
        %v293 = vadd.f32 %v275, %v291
        %v294 = vadd.f32 %v276, %v292
        %295 = vrot.lane.b32.xlu0 %v247, 127
        %v296 = vpop.permute.xlu0 %295
        %297 = vrot.lane.b32.xlu0 %v248, 127
        %v298 = vpop.permute.xlu0 %297
        %v301 = vsel %vm226, %v296, 0.0
        %v302 = vsel %vm226, %v298, 0.0
        %s303 = sld [smem:[#allocation6 + $0x2]]
        %v304 = vstv %s303
        %v305 = vmul.f32 %v304, %v301
        %v306 = vmul.f32 %v304, %v302
        %v307 = vadd.f32 %v281, %v305
        %v308 = vadd.f32 %v282, %v306
        %s309 = sld [smem:[#allocation6 + $0x26]]
        %v310 = vstv %s309
        %v311 = vmul.f32 %v310, %v301
        %v312 = vmul.f32 %v310, %v302
        %v313 = vadd.f32 %v287, %v311
        %v314 = vadd.f32 %v288, %v312
        %s315 = sld [smem:[#allocation6 + $0x4a]]
        %v316 = vstv %s315
        %v317 = vmul.f32 %v316, %v301
        %v318 = vmul.f32 %v316, %v302
        %v319 = vadd.f32 %v293, %v317
        %v320 = vadd.f32 %v294, %v318
        %321 = vrot.lane.b32.xlu0 %v227, 16
        %v322 = vpop.permute.xlu0 %321
        %v323 = vsel %vm236, %v322, %v227
        %324 = vrot.lane.b32.xlu0 %v228, 16
        %v325 = vpop.permute.xlu0 %324
        %v326 = vsel %vm236, %v325, %v228
        %327 = vrot.lane.b32.xlu0 %v323, 16
        %v328 = vpop.permute.xlu0 %327
        %329 = vrot.lane.b32.xlu0 %v326, 16
        %v330 = vpop.permute.xlu0 %329
        %v331 = vsel %vm236, %v328, %v227
        %v332 = vsel %vm236, %v330, %v228
        %335 = vrot.lane.b32.xlu0 %v331, 113
        %v336 = vpop.permute.xlu0 %335
        %337 = vrot.lane.b32.xlu0 %v332, 113
        %v338 = vpop.permute.xlu0 %337
        %v341 = vsel %vm225, %v336, 0.0
        %v342 = vsel %vm225, %v338, 0.0
        %s343 = sld [smem:[#allocation6 + $0x3]]
        %v344 = vstv %s343
        %v345 = vmul.f32 %v344, %v341
        %v346 = vmul.f32 %v344, %v342
        %v347 = vadd.f32 %v307, %v345
        %v348 = vadd.f32 %v308, %v346
        %s349 = sld [smem:[#allocation6 + $0x27]]
        %v350 = vstv %s349
        %v351 = vmul.f32 %v350, %v341
        %v352 = vmul.f32 %v350, %v342
        %v353 = vadd.f32 %v313, %v351
        %v354 = vadd.f32 %v314, %v352
        %s355 = sld [smem:[#allocation6 + $0x4b]]
        %v356 = vstv %s355
        %v357 = vmul.f32 %v356, %v341
        %v358 = vmul.f32 %v356, %v342
        %v359 = vadd.f32 %v319, %v357
        %v360 = vadd.f32 %v320, %v358
        %s361 = sld [smem:[#allocation6 + $0x4]]
        %v362 = vstv %s361
        %v363 = vmul.f32 %v362, %v227
        %v364 = vmul.f32 %v362, %v228
        %v365 = vadd.f32 %v347, %v363
        %v366 = vadd.f32 %v348, %v364
        %s367 = sld [smem:[#allocation6 + $0x28]]
        %v368 = vstv %s367
        %v369 = vmul.f32 %v368, %v227
        %v370 = vmul.f32 %v368, %v228
        %v371 = vadd.f32 %v353, %v369
        %v372 = vadd.f32 %v354, %v370
        %s373 = sld [smem:[#allocation6 + $0x4c]]
        %v374 = vstv %s373
        %v375 = vmul.f32 %v374, %v227
        %v376 = vmul.f32 %v374, %v228
        %v377 = vadd.f32 %v359, %v375
        %v378 = vadd.f32 %v360, %v376
        %379 = vrot.lane.b32.xlu0 %v331, 127
        %v380 = vpop.permute.xlu0 %379
        %381 = vrot.lane.b32.xlu0 %v332, 127
        %v382 = vpop.permute.xlu0 %381
        %v385 = vsel %vm226, %v380, 0.0
        %v386 = vsel %vm226, %v382, 0.0
        %s387 = sld [smem:[#allocation6 + $0x5]]
        %v388 = vstv %s387
        %v389 = vmul.f32 %v388, %v385
        %v390 = vmul.f32 %v388, %v386
        %v391 = vadd.f32 %v365, %v389
        %v392 = vadd.f32 %v366, %v390
        %s393 = sld [smem:[#allocation6 + $0x29]]
        %v394 = vstv %s393
        %v395 = vmul.f32 %v394, %v385
        %v396 = vmul.f32 %v394, %v386
        %v397 = vadd.f32 %v371, %v395
        %v398 = vadd.f32 %v372, %v396
        %s399 = sld [smem:[#allocation6 + $0x4d]]
        %v400 = vstv %s399
        %v401 = vmul.f32 %v400, %v385
        %v402 = vmul.f32 %v400, %v386
        %v403 = vadd.f32 %v377, %v401
        %v404 = vadd.f32 %v378, %v402
        %v405 = vrot.slane %v227, 1
        %v406 = vrot.slane %v228, 1
        %vm407 = vcmp.lt.s32.totalorder %v217, 7
        %v408 = vsel %vm407, %v405, %v406
        %v409 = vsel %vm407, %v406, %v405
        %v410 = vsel %vm223, %v408, 0.0
        %v411 = vsel %vm224, %v409, 0.0
        %412 = vrot.lane.b32.xlu0 %v410, 16
        %v413 = vpop.permute.xlu0 %412
        %v414 = vsel %vm236, %v413, %v410
        %415 = vrot.lane.b32.xlu0 %v411, 16
        %v416 = vpop.permute.xlu0 %415
        %v417 = vsel %vm236, %v416, %v411
        %418 = vrot.lane.b32.xlu0 %v414, 16
        %v419 = vpop.permute.xlu0 %418
        %420 = vrot.lane.b32.xlu0 %v417, 16
        %v421 = vpop.permute.xlu0 %420
        %v422 = vsel %vm236, %v419, %v410
        %v423 = vsel %vm236, %v421, %v411
        %426 = vrot.lane.b32.xlu0 %v422, 113
        %v427 = vpop.permute.xlu0 %426
        %428 = vrot.lane.b32.xlu0 %v423, 113
        %v429 = vpop.permute.xlu0 %428
        %v432 = vsel %vm225, %v427, 0.0
        %v433 = vsel %vm225, %v429, 0.0
        %s434 = sld [smem:[#allocation6 + $0x6]]
        %v435 = vstv %s434
        %v436 = vmul.f32 %v435, %v432
        %v437 = vmul.f32 %v435, %v433
        %v438 = vadd.f32 %v391, %v436
        %v439 = vadd.f32 %v392, %v437
        %s440 = sld [smem:[#allocation6 + $0x2a]]
        %v441 = vstv %s440
        %v442 = vmul.f32 %v441, %v432
        %v443 = vmul.f32 %v441, %v433
        %v444 = vadd.f32 %v397, %v442
        %v445 = vadd.f32 %v398, %v443
        %s446 = sld [smem:[#allocation6 + $0x4e]]
        %v447 = vstv %s446
        %v448 = vmul.f32 %v447, %v432
        %v449 = vmul.f32 %v447, %v433
        %v450 = vadd.f32 %v403, %v448
        %v451 = vadd.f32 %v404, %v449
        %s452 = sld [smem:[#allocation6 + $0x7]]
        %v453 = vstv %s452
        %v454 = vmul.f32 %v453, %v410
        %v455 = vmul.f32 %v453, %v411
        %v456 = vadd.f32 %v438, %v454
        %v457 = vadd.f32 %v439, %v455
        %s458 = sld [smem:[#allocation6 + $0x2b]]
        %v459 = vstv %s458
        %v460 = vmul.f32 %v459, %v410
        %v461 = vmul.f32 %v459, %v411
        %v462 = vadd.f32 %v444, %v460
        %v463 = vadd.f32 %v445, %v461
        %s464 = sld [smem:[#allocation6 + $0x4f]]
        %v465 = vstv %s464
        %v466 = vmul.f32 %v465, %v410
        %v467 = vmul.f32 %v465, %v411
        %v468 = vadd.f32 %v450, %v466
        %v469 = vadd.f32 %v451, %v467
        %470 = vrot.lane.b32.xlu0 %v422, 127
        %v471 = vpop.permute.xlu0 %470
        %472 = vrot.lane.b32.xlu0 %v423, 127
        %v473 = vpop.permute.xlu0 %472
        %v476 = vsel %vm226, %v471, 0.0
        %v477 = vsel %vm226, %v473, 0.0
        %s478 = sld [smem:[#allocation6 + $0x8]]
        %v479 = vstv %s478
        %v480 = vmul.f32 %v479, %v476
        %v481 = vmul.f32 %v479, %v477
        %v482 = vadd.f32 %v456, %v480
        %v483 = vadd.f32 %v457, %v481
        %s484 = sld [smem:[#allocation6 + $0x2c]]
        %v485 = vstv %s484
        %v486 = vmul.f32 %v485, %v476
        %v487 = vmul.f32 %v485, %v477
        %v488 = vadd.f32 %v462, %v486
        %v489 = vadd.f32 %v463, %v487
        %s490 = sld [smem:[#allocation6 + $0x50]]
        %v491 = vstv %s490
        %v492 = vmul.f32 %v491, %v476
        %v493 = vmul.f32 %v491, %v477
        %v494 = vadd.f32 %v468, %v492
        %v495 = vadd.f32 %v469, %v493
        %s496 = scalar_lea.vmem %s184, 16 [#allocation2]
        %v497 = vld [vmem:[%s496] sm:$0xff]
        %v498 = vld [vmem:[%s496 + $0x8] sm:$0xff]
        %v499 = vrot.slane %v497, 7
        %v500 = vrot.slane %v498, 7
        %v501 = vsel %vm231, %v499, %v500
        %v502 = vsel %vm231, %v500, %v499
        %v503 = vsel %vm221, %v502, 0.0
        %v504 = vsel %vm222, %v501, 0.0
        %505 = vrot.lane.b32.xlu0 %v503, 16
        %v506 = vpop.permute.xlu0 %505
        %v507 = vsel %vm236, %v506, %v503
        %508 = vrot.lane.b32.xlu0 %v504, 16
        %v509 = vpop.permute.xlu0 %508
        %v510 = vsel %vm236, %v509, %v504
        %511 = vrot.lane.b32.xlu0 %v507, 16
        %v512 = vpop.permute.xlu0 %511
        %513 = vrot.lane.b32.xlu0 %v510, 16
        %v514 = vpop.permute.xlu0 %513
        %v515 = vsel %vm236, %v512, %v503
        %v516 = vsel %vm236, %v514, %v504
        %519 = vrot.lane.b32.xlu0 %v515, 113
        %v520 = vpop.permute.xlu0 %519
        %521 = vrot.lane.b32.xlu0 %v516, 113
        %v522 = vpop.permute.xlu0 %521
        %v525 = vsel %vm225, %v520, 0.0
        %v526 = vsel %vm225, %v522, 0.0
        %s527 = sld [smem:[#allocation6 + $0x9]]
        %v528 = vstv %s527
        %v529 = vmul.f32 %v528, %v525
        %v530 = vmul.f32 %v528, %v526
        %v531 = vadd.f32 %v482, %v529
        %v532 = vadd.f32 %v483, %v530
        %s533 = sld [smem:[#allocation6 + $0x2d]]
        %v534 = vstv %s533
        %v535 = vmul.f32 %v534, %v525
        %v536 = vmul.f32 %v534, %v526
        %v537 = vadd.f32 %v488, %v535
        %v538 = vadd.f32 %v489, %v536
        %s539 = sld [smem:[#allocation6 + $0x51]]
        %v540 = vstv %s539
        %v541 = vmul.f32 %v540, %v525
        %v542 = vmul.f32 %v540, %v526
        %v543 = vadd.f32 %v494, %v541
        %v544 = vadd.f32 %v495, %v542
        %s545 = sld [smem:[#allocation6 + $0xa]]
        %v546 = vstv %s545
        %v547 = vmul.f32 %v546, %v503
        %v548 = vmul.f32 %v546, %v504
        %v549 = vadd.f32 %v531, %v547
        %v550 = vadd.f32 %v532, %v548
        %s551 = sld [smem:[#allocation6 + $0x2e]]
        %v552 = vstv %s551
        %v553 = vmul.f32 %v552, %v503
        %v554 = vmul.f32 %v552, %v504
        %v555 = vadd.f32 %v537, %v553
        %v556 = vadd.f32 %v538, %v554
        %s557 = sld [smem:[#allocation6 + $0x52]]
        %v558 = vstv %s557
        %v559 = vmul.f32 %v558, %v503
        %v560 = vmul.f32 %v558, %v504
        %v561 = vadd.f32 %v543, %v559
        %v562 = vadd.f32 %v544, %v560
        %563 = vrot.lane.b32.xlu0 %v515, 127
        %v564 = vpop.permute.xlu0 %563
        %565 = vrot.lane.b32.xlu0 %v516, 127
        %v566 = vpop.permute.xlu0 %565
        %v569 = vsel %vm226, %v564, 0.0
        %v570 = vsel %vm226, %v566, 0.0
        %s571 = sld [smem:[#allocation6 + $0xb]]
        %v572 = vstv %s571
        %v573 = vmul.f32 %v572, %v569
        %v574 = vmul.f32 %v572, %v570
        %v575 = vadd.f32 %v549, %v573
        %v576 = vadd.f32 %v550, %v574
        %s577 = sld [smem:[#allocation6 + $0x2f]]
        %v578 = vstv %s577
        %v579 = vmul.f32 %v578, %v569
        %v580 = vmul.f32 %v578, %v570
        %v581 = vadd.f32 %v555, %v579
        %v582 = vadd.f32 %v556, %v580
        %s583 = sld [smem:[#allocation6 + $0x53]]
        %v584 = vstv %s583
        %v585 = vmul.f32 %v584, %v569
        %v586 = vmul.f32 %v584, %v570
        %v587 = vadd.f32 %v561, %v585
        %v588 = vadd.f32 %v562, %v586
        %589 = vrot.lane.b32.xlu0 %v497, 16
        %v590 = vpop.permute.xlu0 %589
        %v591 = vsel %vm236, %v590, %v497
        %592 = vrot.lane.b32.xlu0 %v498, 16
        %v593 = vpop.permute.xlu0 %592
        %v594 = vsel %vm236, %v593, %v498
        %595 = vrot.lane.b32.xlu0 %v591, 16
        %v596 = vpop.permute.xlu0 %595
        %597 = vrot.lane.b32.xlu0 %v594, 16
        %v598 = vpop.permute.xlu0 %597
        %v599 = vsel %vm236, %v596, %v497
        %v600 = vsel %vm236, %v598, %v498
        %603 = vrot.lane.b32.xlu0 %v599, 113
        %v604 = vpop.permute.xlu0 %603
        %605 = vrot.lane.b32.xlu0 %v600, 113
        %v606 = vpop.permute.xlu0 %605
        %v609 = vsel %vm225, %v604, 0.0
        %v610 = vsel %vm225, %v606, 0.0
        %s611 = sld [smem:[#allocation6 + $0xc]]
        %v612 = vstv %s611
        %v613 = vmul.f32 %v612, %v609
        %v614 = vmul.f32 %v612, %v610
        %v615 = vadd.f32 %v575, %v613
        %v616 = vadd.f32 %v576, %v614
        %s617 = sld [smem:[#allocation6 + $0x30]]
        %v618 = vstv %s617
        %v619 = vmul.f32 %v618, %v609
        %v620 = vmul.f32 %v618, %v610
        %v621 = vadd.f32 %v581, %v619
        %v622 = vadd.f32 %v582, %v620
        %s623 = sld [smem:[#allocation6 + $0x54]]
        %v624 = vstv %s623
        %v625 = vmul.f32 %v624, %v609
        %v626 = vmul.f32 %v624, %v610
        %v627 = vadd.f32 %v587, %v625
        %v628 = vadd.f32 %v588, %v626
        %s629 = sld [smem:[#allocation6 + $0xd]]
        %v630 = vstv %s629
        %v631 = vmul.f32 %v630, %v497
        %v632 = vmul.f32 %v630, %v498
        %v633 = vadd.f32 %v615, %v631
        %v634 = vadd.f32 %v616, %v632
        %s635 = sld [smem:[#allocation6 + $0x31]]
        %v636 = vstv %s635
        %v637 = vmul.f32 %v636, %v497
        %v638 = vmul.f32 %v636, %v498
        %v639 = vadd.f32 %v621, %v637
        %v640 = vadd.f32 %v622, %v638
        %s641 = sld [smem:[#allocation6 + $0x55]]
        %v642 = vstv %s641
        %v643 = vmul.f32 %v642, %v497
        %v644 = vmul.f32 %v642, %v498
        %v645 = vadd.f32 %v627, %v643
        %v646 = vadd.f32 %v628, %v644
        %647 = vrot.lane.b32.xlu0 %v599, 127
        %v648 = vpop.permute.xlu0 %647
        %649 = vrot.lane.b32.xlu0 %v600, 127
        %v650 = vpop.permute.xlu0 %649
        %v653 = vsel %vm226, %v648, 0.0
        %v654 = vsel %vm226, %v650, 0.0
        %s655 = sld [smem:[#allocation6 + $0xe]]
        %v656 = vstv %s655
        %v657 = vmul.f32 %v656, %v653
        %v658 = vmul.f32 %v656, %v654
        %v659 = vadd.f32 %v633, %v657
        %v660 = vadd.f32 %v634, %v658
        %s661 = sld [smem:[#allocation6 + $0x32]]
        %v662 = vstv %s661
        %v663 = vmul.f32 %v662, %v653
        %v664 = vmul.f32 %v662, %v654
        %v665 = vadd.f32 %v639, %v663
        %v666 = vadd.f32 %v640, %v664
        %s667 = sld [smem:[#allocation6 + $0x56]]
        %v668 = vstv %s667
        %v669 = vmul.f32 %v668, %v653
        %v670 = vmul.f32 %v668, %v654
        %v671 = vadd.f32 %v645, %v669
        %v672 = vadd.f32 %v646, %v670
        %v673 = vrot.slane %v497, 1
        %v674 = vrot.slane %v498, 1
        %v675 = vsel %vm407, %v673, %v674
        %v676 = vsel %vm407, %v674, %v673
        %v677 = vsel %vm223, %v675, 0.0
        %v678 = vsel %vm224, %v676, 0.0
        %679 = vrot.lane.b32.xlu0 %v677, 16
        %v680 = vpop.permute.xlu0 %679
        %v681 = vsel %vm236, %v680, %v677
        %682 = vrot.lane.b32.xlu0 %v678, 16
        %v683 = vpop.permute.xlu0 %682
        %v684 = vsel %vm236, %v683, %v678
        %685 = vrot.lane.b32.xlu0 %v681, 16
        %v686 = vpop.permute.xlu0 %685
        %687 = vrot.lane.b32.xlu0 %v684, 16
        %v688 = vpop.permute.xlu0 %687
        %v689 = vsel %vm236, %v686, %v677
        %v690 = vsel %vm236, %v688, %v678
        %693 = vrot.lane.b32.xlu0 %v689, 113
        %v694 = vpop.permute.xlu0 %693
        %695 = vrot.lane.b32.xlu0 %v690, 113
        %v696 = vpop.permute.xlu0 %695
        %v699 = vsel %vm225, %v694, 0.0
        %v700 = vsel %vm225, %v696, 0.0
        %s701 = sld [smem:[#allocation6 + $0xf]]
        %v702 = vstv %s701
        %v703 = vmul.f32 %v702, %v699
        %v704 = vmul.f32 %v702, %v700
        %v705 = vadd.f32 %v659, %v703
        %v706 = vadd.f32 %v660, %v704
        %s707 = sld [smem:[#allocation6 + $0x33]]
        %v708 = vstv %s707
        %v709 = vmul.f32 %v708, %v699
        %v710 = vmul.f32 %v708, %v700
        %v711 = vadd.f32 %v665, %v709
        %v712 = vadd.f32 %v666, %v710
        %s713 = sld [smem:[#allocation6 + $0x57]]
        %v714 = vstv %s713
        %v715 = vmul.f32 %v714, %v699
        %v716 = vmul.f32 %v714, %v700
        %v717 = vadd.f32 %v671, %v715
        %v718 = vadd.f32 %v672, %v716
        %s719 = sld [smem:[#allocation6 + $0x10]]
        %v720 = vstv %s719
        %v721 = vmul.f32 %v720, %v677
        %v722 = vmul.f32 %v720, %v678
        %v723 = vadd.f32 %v705, %v721
        %v724 = vadd.f32 %v706, %v722
        %s725 = sld [smem:[#allocation6 + $0x34]]
        %v726 = vstv %s725
        %v727 = vmul.f32 %v726, %v677
        %v728 = vmul.f32 %v726, %v678
        %v729 = vadd.f32 %v711, %v727
        %v730 = vadd.f32 %v712, %v728
        %s731 = sld [smem:[#allocation6 + $0x58]]
        %v732 = vstv %s731
        %v733 = vmul.f32 %v732, %v677
        %v734 = vmul.f32 %v732, %v678
        %v735 = vadd.f32 %v717, %v733
        %v736 = vadd.f32 %v718, %v734
        %737 = vrot.lane.b32.xlu0 %v689, 127
        %v738 = vpop.permute.xlu0 %737
        %739 = vrot.lane.b32.xlu0 %v690, 127
        %v740 = vpop.permute.xlu0 %739
        %v743 = vsel %vm226, %v738, 0.0
        %v744 = vsel %vm226, %v740, 0.0
        %s745 = sld [smem:[#allocation6 + $0x11]]
        %v746 = vstv %s745
        %v747 = vmul.f32 %v746, %v743
        %v748 = vmul.f32 %v746, %v744
        %v749 = vadd.f32 %v723, %v747
        %v750 = vadd.f32 %v724, %v748
        %s751 = sld [smem:[#allocation6 + $0x35]]
        %v752 = vstv %s751
        %v753 = vmul.f32 %v752, %v743
        %v754 = vmul.f32 %v752, %v744
        %v755 = vadd.f32 %v729, %v753
        %v756 = vadd.f32 %v730, %v754
        %s757 = sld [smem:[#allocation6 + $0x59]]
        %v758 = vstv %s757
        %v759 = vmul.f32 %v758, %v743
        %v760 = vmul.f32 %v758, %v744
        %v761 = vadd.f32 %v735, %v759
        %v762 = vadd.f32 %v736, %v760
        %s763 = scalar_lea.vmem %s184, 32 [#allocation2]
        %v764 = vld [vmem:[%s763] sm:$0xff]
        %v765 = vld [vmem:[%s763 + $0x8] sm:$0xff]
        %v766 = vrot.slane %v764, 7
        %v767 = vrot.slane %v765, 7
        %v768 = vsel %vm231, %v766, %v767
        %v769 = vsel %vm231, %v767, %v766
        %v770 = vsel %vm221, %v769, 0.0
        %v771 = vsel %vm222, %v768, 0.0
        %772 = vrot.lane.b32.xlu0 %v770, 16
        %v773 = vpop.permute.xlu0 %772
        %v774 = vsel %vm236, %v773, %v770
        %775 = vrot.lane.b32.xlu0 %v771, 16
        %v776 = vpop.permute.xlu0 %775
        %v777 = vsel %vm236, %v776, %v771
        %778 = vrot.lane.b32.xlu0 %v774, 16
        %v779 = vpop.permute.xlu0 %778
        %780 = vrot.lane.b32.xlu0 %v777, 16
        %v781 = vpop.permute.xlu0 %780
        %v782 = vsel %vm236, %v779, %v770
        %v783 = vsel %vm236, %v781, %v771
        %786 = vrot.lane.b32.xlu0 %v782, 113
        %v787 = vpop.permute.xlu0 %786
        %788 = vrot.lane.b32.xlu0 %v783, 113
        %v789 = vpop.permute.xlu0 %788
        %v792 = vsel %vm225, %v787, 0.0
        %v793 = vsel %vm225, %v789, 0.0
        %s794 = sld [smem:[#allocation6 + $0x12]]
        %v795 = vstv %s794
        %v796 = vmul.f32 %v795, %v792
        %v797 = vmul.f32 %v795, %v793
        %v798 = vadd.f32 %v749, %v796
        %v799 = vadd.f32 %v750, %v797
        %s800 = sld [smem:[#allocation6 + $0x36]]
        %v801 = vstv %s800
        %v802 = vmul.f32 %v801, %v792
        %v803 = vmul.f32 %v801, %v793
        %v804 = vadd.f32 %v755, %v802
        %v805 = vadd.f32 %v756, %v803
        %s806 = sld [smem:[#allocation6 + $0x5a]]
        %v807 = vstv %s806
        %v808 = vmul.f32 %v807, %v792
        %v809 = vmul.f32 %v807, %v793
        %v810 = vadd.f32 %v761, %v808
        %v811 = vadd.f32 %v762, %v809
        %s812 = sld [smem:[#allocation6 + $0x13]]
        %v813 = vstv %s812
        %v814 = vmul.f32 %v813, %v770
        %v815 = vmul.f32 %v813, %v771
        %v816 = vadd.f32 %v798, %v814
        %v817 = vadd.f32 %v799, %v815
        %s818 = sld [smem:[#allocation6 + $0x37]]
        %v819 = vstv %s818
        %v820 = vmul.f32 %v819, %v770
        %v821 = vmul.f32 %v819, %v771
        %v822 = vadd.f32 %v804, %v820
        %v823 = vadd.f32 %v805, %v821
        %s824 = sld [smem:[#allocation6 + $0x5b]]
        %v825 = vstv %s824
        %v826 = vmul.f32 %v825, %v770
        %v827 = vmul.f32 %v825, %v771
        %v828 = vadd.f32 %v810, %v826
        %v829 = vadd.f32 %v811, %v827
        %830 = vrot.lane.b32.xlu0 %v782, 127
        %v831 = vpop.permute.xlu0 %830
        %832 = vrot.lane.b32.xlu0 %v783, 127
        %v833 = vpop.permute.xlu0 %832
        %v836 = vsel %vm226, %v831, 0.0
        %v837 = vsel %vm226, %v833, 0.0
        %s838 = sld [smem:[#allocation6 + $0x14]]
        %v839 = vstv %s838
        %v840 = vmul.f32 %v839, %v836
        %v841 = vmul.f32 %v839, %v837
        %v842 = vadd.f32 %v816, %v840
        %v843 = vadd.f32 %v817, %v841
        %s844 = sld [smem:[#allocation6 + $0x38]]
        %v845 = vstv %s844
        %v846 = vmul.f32 %v845, %v836
        %v847 = vmul.f32 %v845, %v837
        %v848 = vadd.f32 %v822, %v846
        %v849 = vadd.f32 %v823, %v847
        %s850 = sld [smem:[#allocation6 + $0x5c]]
        %v851 = vstv %s850
        %v852 = vmul.f32 %v851, %v836
        %v853 = vmul.f32 %v851, %v837
        %v854 = vadd.f32 %v828, %v852
        %v855 = vadd.f32 %v829, %v853
        %856 = vrot.lane.b32.xlu0 %v764, 16
        %v857 = vpop.permute.xlu0 %856
        %v858 = vsel %vm236, %v857, %v764
        %859 = vrot.lane.b32.xlu0 %v765, 16
        %v860 = vpop.permute.xlu0 %859
        %v861 = vsel %vm236, %v860, %v765
        %862 = vrot.lane.b32.xlu0 %v858, 16
        %v863 = vpop.permute.xlu0 %862
        %864 = vrot.lane.b32.xlu0 %v861, 16
        %v865 = vpop.permute.xlu0 %864
        %v866 = vsel %vm236, %v863, %v764
        %v867 = vsel %vm236, %v865, %v765
        %870 = vrot.lane.b32.xlu0 %v866, 113
        %v871 = vpop.permute.xlu0 %870
        %872 = vrot.lane.b32.xlu0 %v867, 113
        %v873 = vpop.permute.xlu0 %872
        %v876 = vsel %vm225, %v871, 0.0
        %v877 = vsel %vm225, %v873, 0.0
        %s878 = sld [smem:[#allocation6 + $0x15]]
        %v879 = vstv %s878
        %v880 = vmul.f32 %v879, %v876
        %v881 = vmul.f32 %v879, %v877
        %v882 = vadd.f32 %v842, %v880
        %v883 = vadd.f32 %v843, %v881
        %s884 = sld [smem:[#allocation6 + $0x39]]
        %v885 = vstv %s884
        %v886 = vmul.f32 %v885, %v876
        %v887 = vmul.f32 %v885, %v877
        %v888 = vadd.f32 %v848, %v886
        %v889 = vadd.f32 %v849, %v887
        %s890 = sld [smem:[#allocation6 + $0x5d]]
        %v891 = vstv %s890
        %v892 = vmul.f32 %v891, %v876
        %v893 = vmul.f32 %v891, %v877
        %v894 = vadd.f32 %v854, %v892
        %v895 = vadd.f32 %v855, %v893
        %s896 = sld [smem:[#allocation6 + $0x16]]
        %v897 = vstv %s896
        %v898 = vmul.f32 %v897, %v764
        %v899 = vmul.f32 %v897, %v765
        %v900 = vadd.f32 %v882, %v898
        %v901 = vadd.f32 %v883, %v899
        %s902 = sld [smem:[#allocation6 + $0x3a]]
        %v903 = vstv %s902
        %v904 = vmul.f32 %v903, %v764
        %v905 = vmul.f32 %v903, %v765
        %v906 = vadd.f32 %v888, %v904
        %v907 = vadd.f32 %v889, %v905
        %s908 = sld [smem:[#allocation6 + $0x5e]]
        %v909 = vstv %s908
        %v910 = vmul.f32 %v909, %v764
        %v911 = vmul.f32 %v909, %v765
        %v912 = vadd.f32 %v894, %v910
        %v913 = vadd.f32 %v895, %v911
        %914 = vrot.lane.b32.xlu0 %v866, 127
        %v915 = vpop.permute.xlu0 %914
        %916 = vrot.lane.b32.xlu0 %v867, 127
        %v917 = vpop.permute.xlu0 %916
        %v920 = vsel %vm226, %v915, 0.0
        %v921 = vsel %vm226, %v917, 0.0
        %s922 = sld [smem:[#allocation6 + $0x17]]
        %v923 = vstv %s922
        %v924 = vmul.f32 %v923, %v920
        %v925 = vmul.f32 %v923, %v921
        %v926 = vadd.f32 %v900, %v924
        %v927 = vadd.f32 %v901, %v925
        %s928 = sld [smem:[#allocation6 + $0x3b]]
        %v929 = vstv %s928
        %v930 = vmul.f32 %v929, %v920
        %v931 = vmul.f32 %v929, %v921
        %v932 = vadd.f32 %v906, %v930
        %v933 = vadd.f32 %v907, %v931
        %s934 = sld [smem:[#allocation6 + $0x5f]]
        %v935 = vstv %s934
        %v936 = vmul.f32 %v935, %v920
        %v937 = vmul.f32 %v935, %v921
        %v938 = vadd.f32 %v912, %v936
        %v939 = vadd.f32 %v913, %v937
        %v940 = vrot.slane %v764, 1
        %v941 = vrot.slane %v765, 1
        %v942 = vsel %vm407, %v940, %v941
        %v943 = vsel %vm407, %v941, %v940
        %v944 = vsel %vm223, %v942, 0.0
        %v945 = vsel %vm224, %v943, 0.0
        %946 = vrot.lane.b32.xlu0 %v944, 16
        %v947 = vpop.permute.xlu0 %946
        %v948 = vsel %vm236, %v947, %v944
        %949 = vrot.lane.b32.xlu0 %v945, 16
        %v950 = vpop.permute.xlu0 %949
        %v951 = vsel %vm236, %v950, %v945
        %952 = vrot.lane.b32.xlu0 %v948, 16
        %v953 = vpop.permute.xlu0 %952
        %954 = vrot.lane.b32.xlu0 %v951, 16
        %v955 = vpop.permute.xlu0 %954
        %v956 = vsel %vm236, %v953, %v944
        %v957 = vsel %vm236, %v955, %v945
        %960 = vrot.lane.b32.xlu0 %v956, 113
        %v961 = vpop.permute.xlu0 %960
        %962 = vrot.lane.b32.xlu0 %v957, 113
        %v963 = vpop.permute.xlu0 %962
        %v966 = vsel %vm225, %v961, 0.0
        %v967 = vsel %vm225, %v963, 0.0
        %s968 = sld [smem:[#allocation6 + $0x18]]
        %v969 = vstv %s968
        %v970 = vmul.f32 %v969, %v966
        %v971 = vmul.f32 %v969, %v967
        %v972 = vadd.f32 %v926, %v970
        %v973 = vadd.f32 %v927, %v971
        %s974 = sld [smem:[#allocation6 + $0x3c]]
        %v975 = vstv %s974
        %v976 = vmul.f32 %v975, %v966
        %v977 = vmul.f32 %v975, %v967
        %v978 = vadd.f32 %v932, %v976
        %v979 = vadd.f32 %v933, %v977
        %s980 = sld [smem:[#allocation6 + $0x60]]
        %v981 = vstv %s980
        %v982 = vmul.f32 %v981, %v966
        %v983 = vmul.f32 %v981, %v967
        %v984 = vadd.f32 %v938, %v982
        %v985 = vadd.f32 %v939, %v983
        %s986 = sld [smem:[#allocation6 + $0x19]]
        %v987 = vstv %s986
        %v988 = vmul.f32 %v987, %v944
        %v989 = vmul.f32 %v987, %v945
        %v990 = vadd.f32 %v972, %v988
        %v991 = vadd.f32 %v973, %v989
        %s992 = sld [smem:[#allocation6 + $0x3d]]
        %v993 = vstv %s992
        %v994 = vmul.f32 %v993, %v944
        %v995 = vmul.f32 %v993, %v945
        %v996 = vadd.f32 %v978, %v994
        %v997 = vadd.f32 %v979, %v995
        %s998 = sld [smem:[#allocation6 + $0x61]]
        %v999 = vstv %s998
        %v1000 = vmul.f32 %v999, %v944
        %v1001 = vmul.f32 %v999, %v945
        %v1002 = vadd.f32 %v984, %v1000
        %v1003 = vadd.f32 %v985, %v1001
        %1004 = vrot.lane.b32.xlu0 %v956, 127
        %v1005 = vpop.permute.xlu0 %1004
        %1006 = vrot.lane.b32.xlu0 %v957, 127
        %v1007 = vpop.permute.xlu0 %1006
        %v1010 = vsel %vm226, %v1005, 0.0
        %v1011 = vsel %vm226, %v1007, 0.0
        %s1012 = sld [smem:[#allocation6 + $0x1a]]
        %v1013 = vstv %s1012
        %v1014 = vmul.f32 %v1013, %v1010
        %v1015 = vmul.f32 %v1013, %v1011
        %v1016 = vadd.f32 %v990, %v1014
        %v1017 = vadd.f32 %v991, %v1015
        %s1018 = sld [smem:[#allocation6 + $0x3e]]
        %v1019 = vstv %s1018
        %v1020 = vmul.f32 %v1019, %v1010
        %v1021 = vmul.f32 %v1019, %v1011
        %v1022 = vadd.f32 %v996, %v1020
        %v1023 = vadd.f32 %v997, %v1021
        %s1024 = sld [smem:[#allocation6 + $0x62]]
        %v1025 = vstv %s1024
        %v1026 = vmul.f32 %v1025, %v1010
        %v1027 = vmul.f32 %v1025, %v1011
        %v1028 = vadd.f32 %v1002, %v1026
        %v1029 = vadd.f32 %v1003, %v1027
        %s1030 = scalar_lea.vmem %s184, 48 [#allocation2]
        %v1031 = vld [vmem:[%s1030] sm:$0xff]
        %v1032 = vld [vmem:[%s1030 + $0x8] sm:$0xff]
        %v1033 = vrot.slane %v1031, 7
        %v1034 = vrot.slane %v1032, 7
        %v1035 = vsel %vm231, %v1033, %v1034
        %v1036 = vsel %vm231, %v1034, %v1033
        %v1037 = vsel %vm221, %v1036, 0.0
        %v1038 = vsel %vm222, %v1035, 0.0
        %1039 = vrot.lane.b32.xlu0 %v1037, 16
        %v1040 = vpop.permute.xlu0 %1039
        %v1041 = vsel %vm236, %v1040, %v1037
        %1042 = vrot.lane.b32.xlu0 %v1038, 16
        %v1043 = vpop.permute.xlu0 %1042
        %v1044 = vsel %vm236, %v1043, %v1038
        %1045 = vrot.lane.b32.xlu0 %v1041, 16
        %v1046 = vpop.permute.xlu0 %1045
        %1047 = vrot.lane.b32.xlu0 %v1044, 16
        %v1048 = vpop.permute.xlu0 %1047
        %v1049 = vsel %vm236, %v1046, %v1037
        %v1050 = vsel %vm236, %v1048, %v1038
        %1053 = vrot.lane.b32.xlu0 %v1049, 113
        %v1054 = vpop.permute.xlu0 %1053
        %1055 = vrot.lane.b32.xlu0 %v1050, 113
        %v1056 = vpop.permute.xlu0 %1055
        %v1059 = vsel %vm225, %v1054, 0.0
        %v1060 = vsel %vm225, %v1056, 0.0
        %s1061 = sld [smem:[#allocation6 + $0x1b]]
        %v1062 = vstv %s1061
        %v1063 = vmul.f32 %v1062, %v1059
        %v1064 = vmul.f32 %v1062, %v1060
        %v1065 = vadd.f32 %v1016, %v1063
        %v1066 = vadd.f32 %v1017, %v1064
        %s1067 = sld [smem:[#allocation6 + $0x3f]]
        %v1068 = vstv %s1067
        %v1069 = vmul.f32 %v1068, %v1059
        %v1070 = vmul.f32 %v1068, %v1060
        %v1071 = vadd.f32 %v1022, %v1069
        %v1072 = vadd.f32 %v1023, %v1070
        %s1073 = sld [smem:[#allocation6 + $0x63]]
        %v1074 = vstv %s1073
        %v1075 = vmul.f32 %v1074, %v1059
        %v1076 = vmul.f32 %v1074, %v1060
        %v1077 = vadd.f32 %v1028, %v1075
        %v1078 = vadd.f32 %v1029, %v1076
        %s1079 = sld [smem:[#allocation6 + $0x1c]]
        %v1080 = vstv %s1079
        %v1081 = vmul.f32 %v1080, %v1037
        %v1082 = vmul.f32 %v1080, %v1038
        %v1083 = vadd.f32 %v1065, %v1081
        %v1084 = vadd.f32 %v1066, %v1082
        %s1085 = sld [smem:[#allocation6 + $0x40]]
        %v1086 = vstv %s1085
        %v1087 = vmul.f32 %v1086, %v1037
        %v1088 = vmul.f32 %v1086, %v1038
        %v1089 = vadd.f32 %v1071, %v1087
        %v1090 = vadd.f32 %v1072, %v1088
        %s1091 = sld [smem:[#allocation6 + $0x64]]
        %v1092 = vstv %s1091
        %v1093 = vmul.f32 %v1092, %v1037
        %v1094 = vmul.f32 %v1092, %v1038
        %v1095 = vadd.f32 %v1077, %v1093
        %v1096 = vadd.f32 %v1078, %v1094
        %1097 = vrot.lane.b32.xlu0 %v1049, 127
        %v1098 = vpop.permute.xlu0 %1097
        %1099 = vrot.lane.b32.xlu0 %v1050, 127
        %v1100 = vpop.permute.xlu0 %1099
        %v1103 = vsel %vm226, %v1098, 0.0
        %v1104 = vsel %vm226, %v1100, 0.0
        %s1105 = sld [smem:[#allocation6 + $0x1d]]
        %v1106 = vstv %s1105
        %v1107 = vmul.f32 %v1106, %v1103
        %v1108 = vmul.f32 %v1106, %v1104
        %v1109 = vadd.f32 %v1083, %v1107
        %v1110 = vadd.f32 %v1084, %v1108
        %s1111 = sld [smem:[#allocation6 + $0x41]]
        %v1112 = vstv %s1111
        %v1113 = vmul.f32 %v1112, %v1103
        %v1114 = vmul.f32 %v1112, %v1104
        %v1115 = vadd.f32 %v1089, %v1113
        %v1116 = vadd.f32 %v1090, %v1114
        %s1117 = sld [smem:[#allocation6 + $0x65]]
        %v1118 = vstv %s1117
        %v1119 = vmul.f32 %v1118, %v1103
        %v1120 = vmul.f32 %v1118, %v1104
        %v1121 = vadd.f32 %v1095, %v1119
        %v1122 = vadd.f32 %v1096, %v1120
        %1123 = vrot.lane.b32.xlu0 %v1031, 16
        %v1124 = vpop.permute.xlu0 %1123
        %v1125 = vsel %vm236, %v1124, %v1031
        %1126 = vrot.lane.b32.xlu0 %v1032, 16
        %v1127 = vpop.permute.xlu0 %1126
        %v1128 = vsel %vm236, %v1127, %v1032
        %1129 = vrot.lane.b32.xlu0 %v1125, 16
        %v1130 = vpop.permute.xlu0 %1129
        %1131 = vrot.lane.b32.xlu0 %v1128, 16
        %v1132 = vpop.permute.xlu0 %1131
        %v1133 = vsel %vm236, %v1130, %v1031
        %v1134 = vsel %vm236, %v1132, %v1032
        %1137 = vrot.lane.b32.xlu0 %v1133, 113
        %v1138 = vpop.permute.xlu0 %1137
        %1139 = vrot.lane.b32.xlu0 %v1134, 113
        %v1140 = vpop.permute.xlu0 %1139
        %v1143 = vsel %vm225, %v1138, 0.0
        %v1144 = vsel %vm225, %v1140, 0.0
        %s1145 = sld [smem:[#allocation6 + $0x1e]]
        %v1146 = vstv %s1145
        %v1147 = vmul.f32 %v1146, %v1143
        %v1148 = vmul.f32 %v1146, %v1144
        %v1149 = vadd.f32 %v1109, %v1147
        %v1150 = vadd.f32 %v1110, %v1148
        %s1151 = sld [smem:[#allocation6 + $0x42]]
        %v1152 = vstv %s1151
        %v1153 = vmul.f32 %v1152, %v1143
        %v1154 = vmul.f32 %v1152, %v1144
        %v1155 = vadd.f32 %v1115, %v1153
        %v1156 = vadd.f32 %v1116, %v1154
        %s1157 = sld [smem:[#allocation6 + $0x66]]
        %v1158 = vstv %s1157
        %v1159 = vmul.f32 %v1158, %v1143
        %v1160 = vmul.f32 %v1158, %v1144
        %v1161 = vadd.f32 %v1121, %v1159
        %v1162 = vadd.f32 %v1122, %v1160
        %s1163 = sld [smem:[#allocation6 + $0x1f]]
        %v1164 = vstv %s1163
        %v1165 = vmul.f32 %v1164, %v1031
        %v1166 = vmul.f32 %v1164, %v1032
        %v1167 = vadd.f32 %v1149, %v1165
        %v1168 = vadd.f32 %v1150, %v1166
        %s1169 = sld [smem:[#allocation6 + $0x43]]
        %v1170 = vstv %s1169
        %v1171 = vmul.f32 %v1170, %v1031
        %v1172 = vmul.f32 %v1170, %v1032
        %v1173 = vadd.f32 %v1155, %v1171
        %v1174 = vadd.f32 %v1156, %v1172
        %s1175 = sld [smem:[#allocation6 + $0x67]]
        %v1176 = vstv %s1175
        %v1177 = vmul.f32 %v1176, %v1031
        %v1178 = vmul.f32 %v1176, %v1032
        %v1179 = vadd.f32 %v1161, %v1177
        %v1180 = vadd.f32 %v1162, %v1178
        %1181 = vrot.lane.b32.xlu0 %v1133, 127
        %v1182 = vpop.permute.xlu0 %1181
        %1183 = vrot.lane.b32.xlu0 %v1134, 127
        %v1184 = vpop.permute.xlu0 %1183
        %v1187 = vsel %vm226, %v1182, 0.0
        %v1188 = vsel %vm226, %v1184, 0.0
        %s1189 = sld [smem:[#allocation6 + $0x20]]
        %v1190 = vstv %s1189
        %v1191 = vmul.f32 %v1190, %v1187
        %v1192 = vmul.f32 %v1190, %v1188
        %v1193 = vadd.f32 %v1167, %v1191
        %v1194 = vadd.f32 %v1168, %v1192
        %s1195 = sld [smem:[#allocation6 + $0x44]]
        %v1196 = vstv %s1195
        %v1197 = vmul.f32 %v1196, %v1187
        %v1198 = vmul.f32 %v1196, %v1188
        %v1199 = vadd.f32 %v1173, %v1197
        %v1200 = vadd.f32 %v1174, %v1198
        %s1201 = sld [smem:[#allocation6 + $0x68]]
        %v1202 = vstv %s1201
        %v1203 = vmul.f32 %v1202, %v1187
        %v1204 = vmul.f32 %v1202, %v1188
        %v1205 = vadd.f32 %v1179, %v1203
        %v1206 = vadd.f32 %v1180, %v1204
        %v1207 = vrot.slane %v1031, 1
        %v1208 = vrot.slane %v1032, 1
        %v1209 = vsel %vm407, %v1207, %v1208
        %v1210 = vsel %vm407, %v1208, %v1207
        %v1211 = vsel %vm223, %v1209, 0.0
        %v1212 = vsel %vm224, %v1210, 0.0
        %1213 = vrot.lane.b32.xlu0 %v1211, 16
        %v1214 = vpop.permute.xlu0 %1213
        %v1215 = vsel %vm236, %v1214, %v1211
        %1216 = vrot.lane.b32.xlu0 %v1212, 16
        %v1217 = vpop.permute.xlu0 %1216
        %v1218 = vsel %vm236, %v1217, %v1212
        %1219 = vrot.lane.b32.xlu0 %v1215, 16
        %v1220 = vpop.permute.xlu0 %1219
        %1221 = vrot.lane.b32.xlu0 %v1218, 16
        %v1222 = vpop.permute.xlu0 %1221
        %v1223 = vsel %vm236, %v1220, %v1211
        %v1224 = vsel %vm236, %v1222, %v1212
        %1227 = vrot.lane.b32.xlu0 %v1223, 113
        %v1228 = vpop.permute.xlu0 %1227
        %1229 = vrot.lane.b32.xlu0 %v1224, 113
        %v1230 = vpop.permute.xlu0 %1229
        %v1233 = vsel %vm225, %v1228, 0.0
        %v1234 = vsel %vm225, %v1230, 0.0
        %s1235 = sld [smem:[#allocation6 + $0x21]]
        %v1236 = vstv %s1235
        %v1237 = vmul.f32 %v1236, %v1233
        %v1238 = vmul.f32 %v1236, %v1234
        %v1239 = vadd.f32 %v1193, %v1237
        %v1240 = vadd.f32 %v1194, %v1238
        %s1241 = sld [smem:[#allocation6 + $0x45]]
        %v1242 = vstv %s1241
        %v1243 = vmul.f32 %v1242, %v1233
        %v1244 = vmul.f32 %v1242, %v1234
        %v1245 = vadd.f32 %v1199, %v1243
        %v1246 = vadd.f32 %v1200, %v1244
        %s1247 = sld [smem:[#allocation6 + $0x69]]
        %v1248 = vstv %s1247
        %v1249 = vmul.f32 %v1248, %v1233
        %v1250 = vmul.f32 %v1248, %v1234
        %v1251 = vadd.f32 %v1205, %v1249
        %v1252 = vadd.f32 %v1206, %v1250
        %s1253 = sld [smem:[#allocation6 + $0x22]]
        %v1254 = vstv %s1253
        %v1255 = vmul.f32 %v1254, %v1211
        %v1256 = vmul.f32 %v1254, %v1212
        %v1257 = vadd.f32 %v1239, %v1255
        %v1258 = vadd.f32 %v1240, %v1256
        %s1259 = sld [smem:[#allocation6 + $0x46]]
        %v1260 = vstv %s1259
        %v1261 = vmul.f32 %v1260, %v1211
        %v1262 = vmul.f32 %v1260, %v1212
        %v1263 = vadd.f32 %v1245, %v1261
        %v1264 = vadd.f32 %v1246, %v1262
        %s1265 = sld [smem:[#allocation6 + $0x6a]]
        %v1266 = vstv %s1265
        %v1267 = vmul.f32 %v1266, %v1211
        %v1268 = vmul.f32 %v1266, %v1212
        %v1269 = vadd.f32 %v1251, %v1267
        %v1270 = vadd.f32 %v1252, %v1268
        %1271 = vrot.lane.b32.xlu0 %v1223, 127
        %v1272 = vpop.permute.xlu0 %1271
        %1273 = vrot.lane.b32.xlu0 %v1224, 127
        %v1274 = vpop.permute.xlu0 %1273
        %v1277 = vsel %vm226, %v1272, 0.0
        %v1278 = vsel %vm226, %v1274, 0.0
        %s1279 = sld [smem:[#allocation6 + $0x23]]
        %v1280 = vstv %s1279
        %v1281 = vmul.f32 %v1280, %v1277
        %v1282 = vmul.f32 %v1280, %v1278
        %v1283 = vadd.f32 %v1257, %v1281
        %v1284 = vadd.f32 %v1258, %v1282
        %s1285 = sld [smem:[#allocation6 + $0x47]]
        %v1286 = vstv %s1285
        %v1287 = vmul.f32 %v1286, %v1277
        %v1288 = vmul.f32 %v1286, %v1278
        %v1289 = vadd.f32 %v1263, %v1287
        %v1290 = vadd.f32 %v1264, %v1288
        %s1291 = sld [smem:[#allocation6 + $0x6b]]
        %v1292 = vstv %s1291
        %v1293 = vmul.f32 %v1292, %v1277
        %v1294 = vmul.f32 %v1292, %v1278
        %v1295 = vadd.f32 %v1269, %v1293
        %v1296 = vadd.f32 %v1270, %v1294
        %s1297 = sld [smem:[#allocation7]]
        %v1298 = vstv %s1297
        %v1299 = vadd.f32 %v1283, %v1298
        %v1300 = vadd.f32 %v1284, %v1298
        %v1301 = vtanh.pop %v1299
        %v1302 = vtanh.pop %v1300
        %vm1303 = vcmask 130048
        %1304 = vst.msk [vmem:[%s215] sm:$0xff] %vm1303, %v1301
        %1305 = vst.msk [vmem:[%s215 + $0x8] sm:$0xff] %vm1303, %v1302
        %s1306 = sld [smem:[#allocation7 + $0x1]]
        %v1307 = vstv %s1306
        %v1308 = vadd.f32 %v1289, %v1307
        %v1309 = vadd.f32 %v1290, %v1307
        %v1310 = vtanh.pop %v1308
        %v1311 = vtanh.pop %v1309
        %s1312 = scalar_lea.vmem %s215, 16 [#allocation9]
        %1313 = vst.msk [vmem:[%s1312] sm:$0xff] %vm1303, %v1310
        %1314 = vst.msk [vmem:[%s1312 + $0x8] sm:$0xff] %vm1303, %v1311
        %s1315 = sld [smem:[#allocation7 + $0x2]]
        %v1316 = vstv %s1315
        %v1317 = vadd.f32 %v1295, %v1316
        %v1318 = vadd.f32 %v1296, %v1316
        %v1319 = vtanh.pop %v1317
        %v1320 = vtanh.pop %v1318
        %s1321 = scalar_lea.vmem %s215, 32 [#allocation9]
        %1322 = vst.msk [vmem:[%s1321] sm:$0xff] %vm1303, %v1319
        %1323 = vst.msk [vmem:[%s1321 + $0x8] sm:$0xff] %vm1303, %v1320
        %s1324 = sand.u32 %s98, 1
        %s1325 = scalar_lea.sflag [#allocation4], %s1324
        %s1326 = sand.u32 %s98, 1
        %s1327 = smul.addr %s1326, 48
        %s1328 = scalar_lea.vmem [#allocation9], %s1327
        // Predicated region
        $region45: #{tpu_custom_call.1} parent=31 // pred_check
          %p1329 = pneg %p108
        $region46: #{tpu_custom_call.1} parent=31 // pred_check_branch
          %1331 = sbr.rel (%p1329) target = $region48
        $region47: #{tpu_custom_call.1} parent=31 // pred_region
          %s1333 = ssub.s32 768, 768
          %1334 = vsyncadd %s1325, %s1333
          %s1335 = smul.addr %s22, 6
          %s1336 = smul.addr %s1335, 128
          %s1337 = scalar_lea.hbm %s3, %s1336
          %s1338 = sshll.u32 %s1328, 4
          %s1339 = int_to_ptr.vmem [resolvable:$true] %s1338
          %1344 = dma.vmem_to_hbm [thread:$0]  %s1339, 768, %s1337, %s1325, 128, 128, 8
        $region48: #{tpu_custom_call.1} parent=31 // pred_fallthru
          _
      $region32: #{tpu_custom_call.1} parent=5 // pred_fallthru
        _
      %p1345 = scmp.le.s32.totalorder 2, %s17
      // Predicated region
      $region49: #{tpu_custom_call.1} parent=5 // pred_check
        %p1346 = pneg %p1345
      $region50: #{tpu_custom_call.1} parent=5 // pred_check_branch
        %1348 = sbr.rel (%p1346) target = $region52
      $region51: #{tpu_custom_call.1} parent=5 // pred_region
        %s1349 = ssub.s32 %s17, 2
        // Predicated region
        $region53: #{tpu_custom_call.1} parent=51 // pred_check
          %p1350 = pneg %p114
        $region54: #{tpu_custom_call.1} parent=51 // pred_check_branch
          %1352 = sbr.rel (%p1350) target = $region56
        $region55: #{tpu_custom_call.1} parent=51 // pred_region
          %s1353 = sand.u32 %s99, 1
          %s1354 = scalar_lea.sflag [#allocation4], %s1353
          %s1355 = sand.u32 %s99, 1
          %s1356 = smul.addr %s1355, 48
          %s1357 = scalar_lea.vmem [#allocation9], %s1356
          %1358 = dma.done %s1354, 768
        $region56: #{tpu_custom_call.1} parent=51 // pred_fallthru
          _
      $region52: #{tpu_custom_call.1} parent=5 // pred_fallthru
        _
    $region6: #{tpu_custom_call.1} parent=1 // loop_footer
      %s21 = sadd.s32 1, %s17
    $region7: #{tpu_custom_call.1} parent=1 // loop_footer_branch
      %16 = sbr.rel target = $region3
    $region8: #{tpu_custom_call.1} parent=1 // loop_exit
      _
    %1359 = vsyncpa [#allocation3], 1
    %s1360 = scalar_lea.sflag [#allocation3], 1
    %1361 = vsyncpa %s1360, 1
    %1362 = vsyncpa [#allocation4], 1
    %s1363 = scalar_lea.sflag [#allocation4], 1
    %1364 = vsyncpa %s1363, 1
    %1365 = vsyncpa [#allocation5], 1
    %s1366 = scalar_lea.sflag [#allocation5], 1
    %1367 = vsyncpa %s1366, 1
    %1368 = vsyncpa [#allocation8], 1

</llo_original>
